<compile_context>
chip_gen: v5e
topology: v5e:2x2
jax: 0.10.0
libtpu: 0.0.40
codegen_flags: <defaults>
</compile_context>

<pallas_src>
import functools
import math

import jax
import jax.numpy as jnp
from jax.experimental import pallas as pl
from jax.experimental.pallas import tpu as pltpu

KERNEL_SIZE = 7
PAD = KERNEL_SIZE // 2


def _flat_shift(p, s, hw):
    """shifted[..., f] = p[..., f + s] over the flat spatial axis, zero-filled
    outside [0, hw).  `s` is a static Python int; p is (rows, hw)."""
    if s == 0:
        return p
    if abs(s) >= hw:
        return jnp.zeros_like(p)
    rows = p.shape[0]
    zeros = jnp.zeros((rows, abs(s)), dtype=p.dtype)
    if s > 0:
        return jnp.concatenate([p[:, s:], zeros], axis=1)
    return jnp.concatenate([zeros, p[:, :hw + s]], axis=1)


def _spatial_attention_kernel(w_ref, b_ref, mask_ref, x_ref, o_ref,
                              sum_ref, max_ref, *, C, W):
    # w_ref    : SMEM (2*7*7,) f32 conv weights, layout [in_channel, kh, kw]
    # b_ref    : SMEM (1,)     f32 conv bias
    # mask_ref : VMEM (7, H*W) f32 column-validity mask per horizontal tap
    # x_ref    : VMEM (nb, ct, H*W) image/channel tile (native dtype, lane-dense)
    # o_ref    : VMEM (nb, H*W)     attention maps (flat; wrapper reshapes)
    # sum_ref, max_ref : VMEM (nb, H*W) f32 running channel-reduction state
    K, P = KERNEL_SIZE, PAD
    nb, ct, hw = x_ref.shape
    c_idx = pl.program_id(1)
    c_num = pl.num_programs(1)

    x = x_ref[...]                                        # (nb, ct, hw)
    if C % ct != 0:
        # cdiv channel tiling: mask out-of-range channels of the partial last
        # block (sum: zero fill, max: -inf fill).
        ch = jax.lax.broadcasted_iota(jnp.int32, (1, ct, 1), 1) + c_idx * ct
        valid = ch < C
        xf = x.astype(jnp.float32)
        tile_sum = jnp.sum(jnp.where(valid, xf, 0.0), axis=1)       # (nb, hw)
        tile_max = jnp.max(jnp.where(valid, xf, -jnp.inf), axis=1)  # (nb, hw)
    else:
        tile_sum = jnp.sum(x.astype(jnp.float32), axis=1)            # (nb, hw)
        # max needs no f32 accumulation: reduce in native dtype, cast the result.
        tile_max = jnp.max(x, axis=1).astype(jnp.float32)            # (nb, hw)

    @pl.when(c_idx == 0)
    def _init():
        sum_ref[...] = tile_sum
        max_ref[...] = tile_max

    @pl.when(c_idx > 0)
    def _accumulate():
        sum_ref[...] = sum_ref[...] + tile_sum
        max_ref[...] = jnp.maximum(max_ref[...], tile_max)

    @pl.when(c_idx == c_num - 1)
    def _finalize():
        avg_p = sum_ref[...] * jnp.float32(1.0 / C)   # torch.mean(x, dim=1)
        max_p = max_ref[...]                          # torch.max(x, dim=1)

        # 7x7 conv in the flat layout.  Interleave the 2x7 masked column shifts
        # with the weighted accumulation into 7 per-kernel-row partials so only
        # ~2 shifted planes + 7 partials are live at a time (low vreg pressure).
        partials = [None] * K
        for kw in range(K):
            dw = kw - P
            m = mask_ref[kw:kw + 1, :]                         # (1, hw), 0/1 f32
            sa = _flat_shift(avg_p, dw, hw) * m
            sm = _flat_shift(max_p, dw, hw) * m
            for kh in range(K):
                t = (w_ref[kh * K + kw] * sa
                     + w_ref[K * K + kh * K + kw] * sm)
                partials[kh] = t if partials[kh] is None else partials[kh] + t

        # Row taps: lane shifts by dh*W keep the column index, so the column
        # masks applied above remain correct.  Add bias, sigmoid, store.
        acc = jnp.full((nb, hw), b_ref[0], dtype=jnp.float32)
        for kh in range(K):
            acc = acc + _flat_shift(partials[kh], (kh - P) * W, hw)

        o_ref[...] = jax.nn.sigmoid(acc).astype(o_ref.dtype)


def _vmem_capacity_bytes():
    try:
        return int(pltpu.get_tpu_info().vmem_capacity_bytes)
    except Exception:
        return 64 * 1024 * 1024   # be v7x-conservative if the query fails


def _largest_divisor_leq(n, cap):
    cap = max(1, min(n, cap))
    for d in range(cap, 0, -1):
        if n % d == 0:
            return d
    return 1


def spatial_attention(x, weight, bias, *, block_budget_bytes=None,
                      channel_tile=None, image_tile=None):
    """x: (N, C, H, W); weight: (1, 2, 7, 7); bias: (1,).  Returns (N, 1, H, W).

    channel_tile, if given, should be a multiple of 8 (or >= C); image_tile
    must divide N."""
    N, C, H, W = x.shape
    HW = H * W
    out_dtype = x.dtype
    itemsize = jnp.dtype(x.dtype).itemsize

    # Lane-dense layout: H*W becomes the minor (lane) dim everywhere.
    x_flat = x.reshape(N, C, HW)
    w_flat = weight.reshape(-1).astype(jnp.float32)     # (98,) [in_c, kh, kw]
    b = bias.reshape(-1).astype(jnp.float32)            # (1,)

    # Column-validity masks for the 7 horizontal conv taps in the flat layout
    # (a lane shift by dw must not wrap across image rows).
    col = jnp.arange(HW, dtype=jnp.int32) % W
    col_masks = jnp.stack(
        [((col + (kw - PAD)) >= 0) & ((col + (kw - PAD)) < W)
         for kw in range(KERNEL_SIZE)]).astype(jnp.float32)          # (7, HW)

    # --- VMEM-aware sizing (v5e/v6e: 128 MiB physical, v7x: 64 MiB). ---------
    safe_vmem = int(_vmem_capacity_bytes() * 0.7)
    if block_budget_bytes is None:
        block_budget_bytes = max(HW * itemsize,
                                 min(16 * 1024 * 1024,
                                     (safe_vmem - 8 * 1024 * 1024) // 2))
    plane_bytes = HW * itemsize
    max_planes = max(1, block_budget_bytes // plane_bytes)   # nb*ct planes/block

    if channel_tile is not None:
        ct = max(1, min(channel_tile, C))
    elif C <= max_planes:
        ct = C
    else:
        # Streamed channel reduction: keep the sublane (channel) tile a
        # multiple of 8; the partial last block is masked in the kernel.
        # TODO(synk): add row-stripe spatial tiling (3-row conv halo) for very
        # large H*W planes where even an 8-channel block overflows VMEM.
        ct = min(C, max(8, (max_planes // 8) * 8))

    if image_tile is not None:
        assert N % image_tile == 0, "image_tile must divide N"
        nb = image_tile
    elif ct == C:
        # Whole channel axis fits in one block: batch images into sublanes to
        # amortize per-grid-step overhead and densify the finalize conv.
        nb = _largest_divisor_leq(N, min(8, max(1, max_planes // max(ct, 1))))
    else:
        nb = 1

    grid = (N // nb, pl.cdiv(C, ct))

    block_bytes = nb * ct * HW * itemsize
    fixed_bytes = (2 * nb * HW * 4                              # sum/max scratch
                   + 2 * KERNEL_SIZE * HW * 4                   # column masks
                   + 2 * nb * HW * jnp.dtype(out_dtype).itemsize)  # output block
    vmem_limit = int(min(safe_vmem,
                         max(32 * 1024 * 1024,
                             2 * block_bytes + fixed_bytes + 8 * 1024 * 1024)))

    kernel = functools.partial(_spatial_attention_kernel, C=C, W=W)

    cost = pl.CostEstimate(
        flops=N * HW * (2 * C + 4 * KERNEL_SIZE * KERNEL_SIZE + 2),
        transcendentals=N * HW,
        bytes_accessed=(N * C * HW * itemsize
                        + N * HW * jnp.dtype(out_dtype).itemsize
                        + KERNEL_SIZE * HW * 4 + w_flat.size * 4 + 4),
    )

    out_flat = pl.pallas_call(
        kernel,
        out_shape=jax.ShapeDtypeStruct((N, HW), out_dtype),
        grid=grid,
        in_specs=[
            pl.BlockSpec(memory_space=pltpu.MemorySpace.SMEM),      # conv weights
            pl.BlockSpec(memory_space=pltpu.MemorySpace.SMEM),      # conv bias
            pl.BlockSpec((KERNEL_SIZE, HW), lambda n, c: (0, 0)),   # column masks
            pl.BlockSpec((nb, ct, HW), lambda n, c: (n, c, 0)),     # input tile
        ],
        # Same output block across the channel axis -> accumulator pattern;
        # lane-dense (nb, H*W) store (unmasked vst).
        out_specs=pl.BlockSpec((nb, HW), lambda n, c: (n, 0)),
        scratch_shapes=[
            pltpu.VMEM((nb, HW), jnp.float32),   # running channel sum
            pltpu.VMEM((nb, HW), jnp.float32),   # running channel max
        ],
        compiler_params=pltpu.CompilerParams(
            dimension_semantics=("parallel", "arbitrary"),
            vmem_limit_bytes=vmem_limit,
        ),
        cost_estimate=cost,
    )(w_flat, b, col_masks, x_flat)

    return out_flat.reshape(N, 1, H, W)


def spatial_attention_ref(x, weight, bias):
    avg_pool = jnp.mean(x, axis=1, keepdims=True)
    max_pool = jnp.max(x, axis=1, keepdims=True)
    combined = jnp.concatenate([avg_pool, max_pool], axis=1)
    out = jax.lax.conv_general_dilated(
        combined, weight, window_strides=(1, 1),
        padding=[(PAD, PAD), (PAD, PAD)],
        dimension_numbers=("NCHW", "OIHW", "NCHW"),
    ) + bias.reshape(1, -1, 1, 1)
    return jax.nn.sigmoid(out)


if __name__ == "__main__":
    key = jax.random.PRNGKey(0)
    kx, kx2, kw_key, kb_key = jax.random.split(key, 4)

    # Deterministic Conv2d(2, 1, kernel_size=7) parameters (torch-style uniform).
    fan_in = 2 * KERNEL_SIZE * KERNEL_SIZE
    bound = 1.0 / math.sqrt(fan_in)
    weight = jax.random.uniform(kw_key, (1, 2, KERNEL_SIZE, KERNEL_SIZE),
                                minval=-bound, maxval=bound, dtype=jnp.float32)
    bias = jax.random.uniform(kb_key, (1,), minval=-bound, maxval=bound,
                              dtype=jnp.float32)

    # Case 1: default sizing -> whole channel axis + both images in one block.
    N, C, H, W = 2, 4, 16, 16
    x = jax.random.normal(kx, (N, C, H, W), dtype=jnp.float32)
    ref = spatial_attention_ref(x, weight, bias)
    out = jax.block_until_ready(spatial_attention(x, weight, bias))
    assert out.shape == (N, 1, H, W), out.shape
    assert jnp.allclose(out, ref, atol=1e-5, rtol=1e-5), \
        float(jnp.max(jnp.abs(out - ref)))

    # Case 2: force streamed channel tiles with a partial last block (C=20 with
    # ct=8 -> 3 steps, last one masked) plus image batching, to exercise the
    # init / accumulate / mask / finalize path used for large-C workloads.
    C2 = 20
    x2 = jax.random.normal(kx2, (N, C2, H, W), dtype=jnp.float32)
    ref2 = spatial_attention_ref(x2, weight, bias)
    out2 = jax.block_until_ready(
        spatial_attention(x2, weight, bias, channel_tile=8, image_tile=2))
    assert out2.shape == (N, 1, H, W), out2.shape
    assert jnp.allclose(out2, ref2, atol=1e-5, rtol=1e-5), \
        float(jnp.max(jnp.abs(out2 - ref2)))

    print("KERNEL_OK")
</pallas_src>

<mosaic_0001>
module attributes {stable_mosaic.version = 11 : i64} {
  func.func @_spatial_attention_kernel(%arg0: i32, %arg1: i32, %arg2: memref<98xf32, #tpu.memory_space<smem>>, %arg3: memref<1xf32, #tpu.memory_space<smem>>, %arg4: memref<7x256xf32, #tpu.memory_space<vmem>>, %arg5: memref<2x4x256xf32, #tpu.memory_space<vmem>>, %arg6: memref<2x256xf32, #tpu.memory_space<vmem>>, %arg7: memref<2x256xf32, #tpu.memory_space<vmem>>, %arg8: memref<2x256xf32, #tpu.memory_space<vmem>>) attributes {dimension_semantics = [#tpu.dimension_semantics<parallel>, #tpu.dimension_semantics<arbitrary>], iteration_bounds = array<i64: 1, 1>, scalar_prefetch = 0 : i64, scratch_operands = 2 : i64, tpu.core_type = #tpu.core_type<tc>, window_params = [{transform_indices = @transform_0, window_bounds = array<i64: 98>}, {transform_indices = @transform_1, window_bounds = array<i64: 1>}, {pipeline_mode = #tpu.pipeline_mode<synchronous>, transform_indices = @transform_2, window_bounds = array<i64: 7, 256>}, {transform_indices = @transform_3, window_bounds = array<i64: 2, 4, 256>}, {transform_indices = @transform_4, window_bounds = array<i64: 2, 256>}]} {
    %c0 = arith.constant 0 : index
    %c0_0 = arith.constant 0 : index
    %c0_1 = arith.constant 0 : index
    %0 = vector.load %arg5[%c0, %c0_0, %c0_1] : memref<2x4x256xf32, #tpu.memory_space<vmem>>, vector<2x4x256xf32>
    %cst = arith.constant dense<0.000000e+00> : vector<2x256xf32>
    %1 = vector.multi_reduction <add>, %0, %cst [1] : vector<2x4x256xf32> to vector<2x256xf32>
    %cst_2 = arith.constant dense<0xFF800000> : vector<2x256xf32>
    %2 = vector.multi_reduction <maximumf>, %0, %cst_2 [1] : vector<2x4x256xf32> to vector<2x256xf32>
    %c0_i32 = arith.constant 0 : i32
    %3 = arith.cmpi eq, %arg1, %c0_i32 : i32
    %4 = arith.extui %3 : i1 to i32
    %c0_i32_3 = arith.constant 0 : i32
    %5 = arith.cmpi ne, %4, %c0_i32_3 : i32
    scf.if %5 {
      %c0_8 = arith.constant 0 : index
      %c0_9 = arith.constant 0 : index
      %12 = vector.load %arg7[%c0_8, %c0_9] : memref<2x256xf32, #tpu.memory_space<vmem>>, vector<2x256xf32>
      tpu.vector_store %arg7[%c0_8, %c0_9], %1 {strides = array<i32>} : memref<2x256xf32, #tpu.memory_space<vmem>>, vector<2x256xf32>,
      %c0_10 = arith.constant 0 : index
      %c0_11 = arith.constant 0 : index
      %13 = vector.load %arg8[%c0_10, %c0_11] : memref<2x256xf32, #tpu.memory_space<vmem>>, vector<2x256xf32>
      tpu.vector_store %arg8[%c0_10, %c0_11], %2 {strides = array<i32>} : memref<2x256xf32, #tpu.memory_space<vmem>>, vector<2x256xf32>,
    } else {
    }
    %c0_i32_4 = arith.constant 0 : i32
    %6 = arith.cmpi sgt, %arg1, %c0_i32_4 : i32
    %7 = arith.extui %6 : i1 to i32
    %c0_i32_5 = arith.constant 0 : i32
    %8 = arith.cmpi ne, %7, %c0_i32_5 : i32
    scf.if %8 {
      %c0_8 = arith.constant 0 : index
      %c0_9 = arith.constant 0 : index
      %12 = vector.load %arg7[%c0_8, %c0_9] : memref<2x256xf32, #tpu.memory_space<vmem>>, vector<2x256xf32>
      %13 = arith.addf %12, %1 : vector<2x256xf32>
      %c0_10 = arith.constant 0 : index
      %c0_11 = arith.constant 0 : index
      %14 = vector.load %arg7[%c0_10, %c0_11] : memref<2x256xf32, #tpu.memory_space<vmem>>, vector<2x256xf32>
      tpu.vector_store %arg7[%c0_10, %c0_11], %13 {strides = array<i32>} : memref<2x256xf32, #tpu.memory_space<vmem>>, vector<2x256xf32>,
      %c0_12 = arith.constant 0 : index
      %c0_13 = arith.constant 0 : index
      %15 = vector.load %arg8[%c0_12, %c0_13] : memref<2x256xf32, #tpu.memory_space<vmem>>, vector<2x256xf32>
      %16 = arith.maximumf %15, %2 : vector<2x256xf32>
      %c0_14 = arith.constant 0 : index
      %c0_15 = arith.constant 0 : index
      %17 = vector.load %arg8[%c0_14, %c0_15] : memref<2x256xf32, #tpu.memory_space<vmem>>, vector<2x256xf32>
      tpu.vector_store %arg8[%c0_14, %c0_15], %16 {strides = array<i32>} : memref<2x256xf32, #tpu.memory_space<vmem>>, vector<2x256xf32>,
    } else {
    }
    %c0_i32_6 = arith.constant 0 : i32
    %9 = arith.cmpi eq, %arg1, %c0_i32_6 : i32
    %10 = arith.extui %9 : i1 to i32
    %c0_i32_7 = arith.constant 0 : i32
    %11 = arith.cmpi ne, %10, %c0_i32_7 : i32
    scf.if %11 {
      %c0_8 = arith.constant 0 : index
      %c0_9 = arith.constant 0 : index
      %12 = vector.load %arg7[%c0_8, %c0_9] : memref<2x256xf32, #tpu.memory_space<vmem>>, vector<2x256xf32>
      %cst_10 = arith.constant 2.500000e-01 : f32
      %13 = vector.broadcast %cst_10 : f32 to vector<2x256xf32>
      %14 = arith.mulf %12, %13 : vector<2x256xf32>
      %c0_11 = arith.constant 0 : index
      %c0_12 = arith.constant 0 : index
      %15 = vector.load %arg8[%c0_11, %c0_12] : memref<2x256xf32, #tpu.memory_space<vmem>>, vector<2x256xf32>
      %c0_13 = arith.constant 0 : index
      %c0_14 = arith.constant 0 : index
      %16 = vector.load %arg4[%c0_13, %c0_14] : memref<7x256xf32, #tpu.memory_space<vmem>>, vector<1x256xf32>
      %cst_15 = arith.constant 0.000000e+00 : f32
      %17 = vector.broadcast %cst_15 : f32 to vector<2x3xf32>
      %18 = vector.extract_strided_slice %14 {offsets = [0, 0], sizes = [2, 253], strides = [1, 1]} : vector<2x256xf32> to vector<2x253xf32>
      %19 = tpu.concatenate %17, %18 in 1 : vector<2x3xf32>, vector<2x253xf32> -> vector<2x256xf32>
      %20 = vector.broadcast %16 : vector<1x256xf32> to vector<2x256xf32>
      %21 = arith.mulf %19, %20 : vector<2x256xf32>
      %cst_16 = arith.constant 0.000000e+00 : f32
      %22 = vector.broadcast %cst_16 : f32 to vector<2x3xf32>
      %23 = vector.extract_strided_slice %15 {offsets = [0, 0], sizes = [2, 253], strides = [1, 1]} : vector<2x256xf32> to vector<2x253xf32>
      %24 = tpu.concatenate %22, %23 in 1 : vector<2x3xf32>, vector<2x253xf32> -> vector<2x256xf32>
      %25 = vector.broadcast %16 : vector<1x256xf32> to vector<2x256xf32>
      %26 = arith.mulf %24, %25 : vector<2x256xf32>
      %c0_17 = arith.constant 0 : index
      %27 = memref.load %arg2[%c0_17] : memref<98xf32, #tpu.memory_space<smem>>
      %28 = vector.broadcast %27 : f32 to vector<2x256xf32>
      %29 = arith.mulf %28, %21 : vector<2x256xf32>
      %c49 = arith.constant 49 : index
      %30 = memref.load %arg2[%c49] : memref<98xf32, #tpu.memory_space<smem>>
      %31 = vector.broadcast %30 : f32 to vector<2x256xf32>
      %32 = arith.mulf %31, %26 : vector<2x256xf32>
      %33 = arith.addf %29, %32 : vector<2x256xf32>
      %c7 = arith.constant 7 : index
      %34 = memref.load %arg2[%c7] : memref<98xf32, #tpu.memory_space<smem>>
      %35 = vector.broadcast %34 : f32 to vector<2x256xf32>
      %36 = arith.mulf %35, %21 : vector<2x256xf32>
      %c56 = arith.constant 56 : index
      %37 = memref.load %arg2[%c56] : memref<98xf32, #tpu.memory_space<smem>>
      %38 = vector.broadcast %37 : f32 to vector<2x256xf32>
      %39 = arith.mulf %38, %26 : vector<2x256xf32>
      %40 = arith.addf %36, %39 : vector<2x256xf32>
      %c14 = arith.constant 14 : index
      %41 = memref.load %arg2[%c14] : memref<98xf32, #tpu.memory_space<smem>>
      %42 = vector.broadcast %41 : f32 to vector<2x256xf32>
      %43 = arith.mulf %42, %21 : vector<2x256xf32>
      %c63 = arith.constant 63 : index
      %44 = memref.load %arg2[%c63] : memref<98xf32, #tpu.memory_space<smem>>
      %45 = vector.broadcast %44 : f32 to vector<2x256xf32>
      %46 = arith.mulf %45, %26 : vector<2x256xf32>
      %47 = arith.addf %43, %46 : vector<2x256xf32>
      %c21 = arith.constant 21 : index
      %48 = memref.load %arg2[%c21] : memref<98xf32, #tpu.memory_space<smem>>
      %49 = vector.broadcast %48 : f32 to vector<2x256xf32>
      %50 = arith.mulf %49, %21 : vector<2x256xf32>
      %c70 = arith.constant 70 : index
      %51 = memref.load %arg2[%c70] : memref<98xf32, #tpu.memory_space<smem>>
      %52 = vector.broadcast %51 : f32 to vector<2x256xf32>
      %53 = arith.mulf %52, %26 : vector<2x256xf32>
      %54 = arith.addf %50, %53 : vector<2x256xf32>
      %c28 = arith.constant 28 : index
      %55 = memref.load %arg2[%c28] : memref<98xf32, #tpu.memory_space<smem>>
      %56 = vector.broadcast %55 : f32 to vector<2x256xf32>
      %57 = arith.mulf %56, %21 : vector<2x256xf32>
      %c77 = arith.constant 77 : index
      %58 = memref.load %arg2[%c77] : memref<98xf32, #tpu.memory_space<smem>>
      %59 = vector.broadcast %58 : f32 to vector<2x256xf32>
      %60 = arith.mulf %59, %26 : vector<2x256xf32>
      %61 = arith.addf %57, %60 : vector<2x256xf32>
      %c35 = arith.constant 35 : index
      %62 = memref.load %arg2[%c35] : memref<98xf32, #tpu.memory_space<smem>>
      %63 = vector.broadcast %62 : f32 to vector<2x256xf32>
      %64 = arith.mulf %63, %21 : vector<2x256xf32>
      %c84 = arith.constant 84 : index
      %65 = memref.load %arg2[%c84] : memref<98xf32, #tpu.memory_space<smem>>
      %66 = vector.broadcast %65 : f32 to vector<2x256xf32>
      %67 = arith.mulf %66, %26 : vector<2x256xf32>
      %68 = arith.addf %64, %67 : vector<2x256xf32>
      %c42 = arith.constant 42 : index
      %69 = memref.load %arg2[%c42] : memref<98xf32, #tpu.memory_space<smem>>
      %70 = vector.broadcast %69 : f32 to vector<2x256xf32>
      %71 = arith.mulf %70, %21 : vector<2x256xf32>
      %c91 = arith.constant 91 : index
      %72 = memref.load %arg2[%c91] : memref<98xf32, #tpu.memory_space<smem>>
      %73 = vector.broadcast %72 : f32 to vector<2x256xf32>
      %74 = arith.mulf %73, %26 : vector<2x256xf32>
      %75 = arith.addf %71, %74 : vector<2x256xf32>
      %c1 = arith.constant 1 : index
      %c0_18 = arith.constant 0 : index
      %76 = vector.load %arg4[%c1, %c0_18] : memref<7x256xf32, #tpu.memory_space<vmem>>, vector<1x256xf32>
      %cst_19 = arith.constant 0.000000e+00 : f32
      %77 = vector.broadcast %cst_19 : f32 to vector<2x2xf32>
      %78 = vector.extract_strided_slice %14 {offsets = [0, 0], sizes = [2, 254], strides = [1, 1]} : vector<2x256xf32> to vector<2x254xf32>
      %79 = tpu.concatenate %77, %78 in 1 : vector<2x2xf32>, vector<2x254xf32> -> vector<2x256xf32>
      %80 = vector.broadcast %76 : vector<1x256xf32> to vector<2x256xf32>
      %81 = arith.mulf %79, %80 : vector<2x256xf32>
      %cst_20 = arith.constant 0.000000e+00 : f32
      %82 = vector.broadcast %cst_20 : f32 to vector<2x2xf32>
      %83 = vector.extract_strided_slice %15 {offsets = [0, 0], sizes = [2, 254], strides = [1, 1]} : vector<2x256xf32> to vector<2x254xf32>
      %84 = tpu.concatenate %82, %83 in 1 : vector<2x2xf32>, vector<2x254xf32> -> vector<2x256xf32>
      %85 = vector.broadcast %76 : vector<1x256xf32> to vector<2x256xf32>
      %86 = arith.mulf %84, %85 : vector<2x256xf32>
      %c1_21 = arith.constant 1 : index
      %87 = memref.load %arg2[%c1_21] : memref<98xf32, #tpu.memory_space<smem>>
      %88 = vector.broadcast %87 : f32 to vector<2x256xf32>
      %89 = arith.mulf %88, %81 : vector<2x256xf32>
      %c50 = arith.constant 50 : index
      %90 = memref.load %arg2[%c50] : memref<98xf32, #tpu.memory_space<smem>>
      %91 = vector.broadcast %90 : f32 to vector<2x256xf32>
      %92 = arith.mulf %91, %86 : vector<2x256xf32>
      %93 = arith.addf %89, %92 : vector<2x256xf32>
      %94 = arith.addf %33, %93 : vector<2x256xf32>
      %c8 = arith.constant 8 : index
      %95 = memref.load %arg2[%c8] : memref<98xf32, #tpu.memory_space<smem>>
      %96 = vector.broadcast %95 : f32 to vector<2x256xf32>
      %97 = arith.mulf %96, %81 : vector<2x256xf32>
      %c57 = arith.constant 57 : index
      %98 = memref.load %arg2[%c57] : memref<98xf32, #tpu.memory_space<smem>>
      %99 = vector.broadcast %98 : f32 to vector<2x256xf32>
      %100 = arith.mulf %99, %86 : vector<2x256xf32>
      %101 = arith.addf %97, %100 : vector<2x256xf32>
      %102 = arith.addf %40, %101 : vector<2x256xf32>
      %c15 = arith.constant 15 : index
      %103 = memref.load %arg2[%c15] : memref<98xf32, #tpu.memory_space<smem>>
      %104 = vector.broadcast %103 : f32 to vector<2x256xf32>
      %105 = arith.mulf %104, %81 : vector<2x256xf32>
      %c64 = arith.constant 64 : index
      %106 = memref.load %arg2[%c64] : memref<98xf32, #tpu.memory_space<smem>>
      %107 = vector.broadcast %106 : f32 to vector<2x256xf32>
      %108 = arith.mulf %107, %86 : vector<2x256xf32>
      %109 = arith.addf %105, %108 : vector<2x256xf32>
      %110 = arith.addf %47, %109 : vector<2x256xf32>
      %c22 = arith.constant 22 : index
      %111 = memref.load %arg2[%c22] : memref<98xf32, #tpu.memory_space<smem>>
      %112 = vector.broadcast %111 : f32 to vector<2x256xf32>
      %113 = arith.mulf %112, %81 : vector<2x256xf32>
      %c71 = arith.constant 71 : index
      %114 = memref.load %arg2[%c71] : memref<98xf32, #tpu.memory_space<smem>>
      %115 = vector.broadcast %114 : f32 to vector<2x256xf32>
      %116 = arith.mulf %115, %86 : vector<2x256xf32>
      %117 = arith.addf %113, %116 : vector<2x256xf32>
      %118 = arith.addf %54, %117 : vector<2x256xf32>
      %c29 = arith.constant 29 : index
      %119 = memref.load %arg2[%c29] : memref<98xf32, #tpu.memory_space<smem>>
      %120 = vector.broadcast %119 : f32 to vector<2x256xf32>
      %121 = arith.mulf %120, %81 : vector<2x256xf32>
      %c78 = arith.constant 78 : index
      %122 = memref.load %arg2[%c78] : memref<98xf32, #tpu.memory_space<smem>>
      %123 = vector.broadcast %122 : f32 to vector<2x256xf32>
      %124 = arith.mulf %123, %86 : vector<2x256xf32>
      %125 = arith.addf %121, %124 : vector<2x256xf32>
      %126 = arith.addf %61, %125 : vector<2x256xf32>
      %c36 = arith.constant 36 : index
      %127 = memref.load %arg2[%c36] : memref<98xf32, #tpu.memory_space<smem>>
      %128 = vector.broadcast %127 : f32 to vector<2x256xf32>
      %129 = arith.mulf %128, %81 : vector<2x256xf32>
      %c85 = arith.constant 85 : index
      %130 = memref.load %arg2[%c85] : memref<98xf32, #tpu.memory_space<smem>>
      %131 = vector.broadcast %130 : f32 to vector<2x256xf32>
      %132 = arith.mulf %131, %86 : vector<2x256xf32>
      %133 = arith.addf %129, %132 : vector<2x256xf32>
      %134 = arith.addf %68, %133 : vector<2x256xf32>
      %c43 = arith.constant 43 : index
      %135 = memref.load %arg2[%c43] : memref<98xf32, #tpu.memory_space<smem>>
      %136 = vector.broadcast %135 : f32 to vector<2x256xf32>
      %137 = arith.mulf %136, %81 : vector<2x256xf32>
      %c92 = arith.constant 92 : index
      %138 = memref.load %arg2[%c92] : memref<98xf32, #tpu.memory_space<smem>>
      %139 = vector.broadcast %138 : f32 to vector<2x256xf32>
      %140 = arith.mulf %139, %86 : vector<2x256xf32>
      %141 = arith.addf %137, %140 : vector<2x256xf32>
      %142 = arith.addf %75, %141 : vector<2x256xf32>
      %c2 = arith.constant 2 : index
      %c0_22 = arith.constant 0 : index
      %143 = vector.load %arg4[%c2, %c0_22] : memref<7x256xf32, #tpu.memory_space<vmem>>, vector<1x256xf32>
      %cst_23 = arith.constant 0.000000e+00 : f32
      %144 = vector.broadcast %cst_23 : f32 to vector<2x1xf32>
      %145 = vector.extract_strided_slice %14 {offsets = [0, 0], sizes = [2, 255], strides = [1, 1]} : vector<2x256xf32> to vector<2x255xf32>
      %146 = tpu.concatenate %144, %145 in 1 : vector<2x1xf32>, vector<2x255xf32> -> vector<2x256xf32>
      %147 = vector.broadcast %143 : vector<1x256xf32> to vector<2x256xf32>
      %148 = arith.mulf %146, %147 : vector<2x256xf32>
      %cst_24 = arith.constant 0.000000e+00 : f32
      %149 = vector.broadcast %cst_24 : f32 to vector<2x1xf32>
      %150 = vector.extract_strided_slice %15 {offsets = [0, 0], sizes = [2, 255], strides = [1, 1]} : vector<2x256xf32> to vector<2x255xf32>
      %151 = tpu.concatenate %149, %150 in 1 : vector<2x1xf32>, vector<2x255xf32> -> vector<2x256xf32>
      %152 = vector.broadcast %143 : vector<1x256xf32> to vector<2x256xf32>
      %153 = arith.mulf %151, %152 : vector<2x256xf32>
      %c2_25 = arith.constant 2 : index
      %154 = memref.load %arg2[%c2_25] : memref<98xf32, #tpu.memory_space<smem>>
      %155 = vector.broadcast %154 : f32 to vector<2x256xf32>
      %156 = arith.mulf %155, %148 : vector<2x256xf32>
      %c51 = arith.constant 51 : index
      %157 = memref.load %arg2[%c51] : memref<98xf32, #tpu.memory_space<smem>>
      %158 = vector.broadcast %157 : f32 to vector<2x256xf32>
      %159 = arith.mulf %158, %153 : vector<2x256xf32>
      %160 = arith.addf %156, %159 : vector<2x256xf32>
      %161 = arith.addf %94, %160 : vector<2x256xf32>
      %c9 = arith.constant 9 : index
      %162 = memref.load %arg2[%c9] : memref<98xf32, #tpu.memory_space<smem>>
      %163 = vector.broadcast %162 : f32 to vector<2x256xf32>
      %164 = arith.mulf %163, %148 : vector<2x256xf32>
      %c58 = arith.constant 58 : index
      %165 = memref.load %arg2[%c58] : memref<98xf32, #tpu.memory_space<smem>>
      %166 = vector.broadcast %165 : f32 to vector<2x256xf32>
      %167 = arith.mulf %166, %153 : vector<2x256xf32>
      %168 = arith.addf %164, %167 : vector<2x256xf32>
      %169 = arith.addf %102, %168 : vector<2x256xf32>
      %c16 = arith.constant 16 : index
      %170 = memref.load %arg2[%c16] : memref<98xf32, #tpu.memory_space<smem>>
      %171 = vector.broadcast %170 : f32 to vector<2x256xf32>
      %172 = arith.mulf %171, %148 : vector<2x256xf32>
      %c65 = arith.constant 65 : index
      %173 = memref.load %arg2[%c65] : memref<98xf32, #tpu.memory_space<smem>>
      %174 = vector.broadcast %173 : f32 to vector<2x256xf32>
      %175 = arith.mulf %174, %153 : vector<2x256xf32>
      %176 = arith.addf %172, %175 : vector<2x256xf32>
      %177 = arith.addf %110, %176 : vector<2x256xf32>
      %c23 = arith.constant 23 : index
      %178 = memref.load %arg2[%c23] : memref<98xf32, #tpu.memory_space<smem>>
      %179 = vector.broadcast %178 : f32 to vector<2x256xf32>
      %180 = arith.mulf %179, %148 : vector<2x256xf32>
      %c72 = arith.constant 72 : index
      %181 = memref.load %arg2[%c72] : memref<98xf32, #tpu.memory_space<smem>>
      %182 = vector.broadcast %181 : f32 to vector<2x256xf32>
      %183 = arith.mulf %182, %153 : vector<2x256xf32>
      %184 = arith.addf %180, %183 : vector<2x256xf32>
      %185 = arith.addf %118, %184 : vector<2x256xf32>
      %c30 = arith.constant 30 : index
      %186 = memref.load %arg2[%c30] : memref<98xf32, #tpu.memory_space<smem>>
      %187 = vector.broadcast %186 : f32 to vector<2x256xf32>
      %188 = arith.mulf %187, %148 : vector<2x256xf32>
      %c79 = arith.constant 79 : index
      %189 = memref.load %arg2[%c79] : memref<98xf32, #tpu.memory_space<smem>>
      %190 = vector.broadcast %189 : f32 to vector<2x256xf32>
      %191 = arith.mulf %190, %153 : vector<2x256xf32>
      %192 = arith.addf %188, %191 : vector<2x256xf32>
      %193 = arith.addf %126, %192 : vector<2x256xf32>
      %c37 = arith.constant 37 : index
      %194 = memref.load %arg2[%c37] : memref<98xf32, #tpu.memory_space<smem>>
      %195 = vector.broadcast %194 : f32 to vector<2x256xf32>
      %196 = arith.mulf %195, %148 : vector<2x256xf32>
      %c86 = arith.constant 86 : index
      %197 = memref.load %arg2[%c86] : memref<98xf32, #tpu.memory_space<smem>>
      %198 = vector.broadcast %197 : f32 to vector<2x256xf32>
      %199 = arith.mulf %198, %153 : vector<2x256xf32>
      %200 = arith.addf %196, %199 : vector<2x256xf32>
      %201 = arith.addf %134, %200 : vector<2x256xf32>
      %c44 = arith.constant 44 : index
      %202 = memref.load %arg2[%c44] : memref<98xf32, #tpu.memory_space<smem>>
      %203 = vector.broadcast %202 : f32 to vector<2x256xf32>
      %204 = arith.mulf %203, %148 : vector<2x256xf32>
      %c93 = arith.constant 93 : index
      %205 = memref.load %arg2[%c93] : memref<98xf32, #tpu.memory_space<smem>>
      %206 = vector.broadcast %205 : f32 to vector<2x256xf32>
      %207 = arith.mulf %206, %153 : vector<2x256xf32>
      %208 = arith.addf %204, %207 : vector<2x256xf32>
      %209 = arith.addf %142, %208 : vector<2x256xf32>
      %c3 = arith.constant 3 : index
      %c0_26 = arith.constant 0 : index
      %210 = vector.load %arg4[%c3, %c0_26] : memref<7x256xf32, #tpu.memory_space<vmem>>, vector<1x256xf32>
      %211 = vector.broadcast %210 : vector<1x256xf32> to vector<2x256xf32>
      %212 = arith.mulf %14, %211 : vector<2x256xf32>
      %213 = vector.broadcast %210 : vector<1x256xf32> to vector<2x256xf32>
      %214 = arith.mulf %15, %213 : vector<2x256xf32>
      %c3_27 = arith.constant 3 : index
      %215 = memref.load %arg2[%c3_27] : memref<98xf32, #tpu.memory_space<smem>>
      %216 = vector.broadcast %215 : f32 to vector<2x256xf32>
      %217 = arith.mulf %216, %212 : vector<2x256xf32>
      %c52 = arith.constant 52 : index
      %218 = memref.load %arg2[%c52] : memref<98xf32, #tpu.memory_space<smem>>
      %219 = vector.broadcast %218 : f32 to vector<2x256xf32>
      %220 = arith.mulf %219, %214 : vector<2x256xf32>
      %221 = arith.addf %217, %220 : vector<2x256xf32>
      %222 = arith.addf %161, %221 : vector<2x256xf32>
      %c10 = arith.constant 10 : index
      %223 = memref.load %arg2[%c10] : memref<98xf32, #tpu.memory_space<smem>>
      %224 = vector.broadcast %223 : f32 to vector<2x256xf32>
      %225 = arith.mulf %224, %212 : vector<2x256xf32>
      %c59 = arith.constant 59 : index
      %226 = memref.load %arg2[%c59] : memref<98xf32, #tpu.memory_space<smem>>
      %227 = vector.broadcast %226 : f32 to vector<2x256xf32>
      %228 = arith.mulf %227, %214 : vector<2x256xf32>
      %229 = arith.addf %225, %228 : vector<2x256xf32>
      %230 = arith.addf %169, %229 : vector<2x256xf32>
      %c17 = arith.constant 17 : index
      %231 = memref.load %arg2[%c17] : memref<98xf32, #tpu.memory_space<smem>>
      %232 = vector.broadcast %231 : f32 to vector<2x256xf32>
      %233 = arith.mulf %232, %212 : vector<2x256xf32>
      %c66 = arith.constant 66 : index
      %234 = memref.load %arg2[%c66] : memref<98xf32, #tpu.memory_space<smem>>
      %235 = vector.broadcast %234 : f32 to vector<2x256xf32>
      %236 = arith.mulf %235, %214 : vector<2x256xf32>
      %237 = arith.addf %233, %236 : vector<2x256xf32>
      %238 = arith.addf %177, %237 : vector<2x256xf32>
      %c24 = arith.constant 24 : index
      %239 = memref.load %arg2[%c24] : memref<98xf32, #tpu.memory_space<smem>>
      %240 = vector.broadcast %239 : f32 to vector<2x256xf32>
      %241 = arith.mulf %240, %212 : vector<2x256xf32>
      %c73 = arith.constant 73 : index
      %242 = memref.load %arg2[%c73] : memref<98xf32, #tpu.memory_space<smem>>
      %243 = vector.broadcast %242 : f32 to vector<2x256xf32>
      %244 = arith.mulf %243, %214 : vector<2x256xf32>
      %245 = arith.addf %241, %244 : vector<2x256xf32>
      %246 = arith.addf %185, %245 : vector<2x256xf32>
      %c31 = arith.constant 31 : index
      %247 = memref.load %arg2[%c31] : memref<98xf32, #tpu.memory_space<smem>>
      %248 = vector.broadcast %247 : f32 to vector<2x256xf32>
      %249 = arith.mulf %248, %212 : vector<2x256xf32>
      %c80 = arith.constant 80 : index
      %250 = memref.load %arg2[%c80] : memref<98xf32, #tpu.memory_space<smem>>
      %251 = vector.broadcast %250 : f32 to vector<2x256xf32>
      %252 = arith.mulf %251, %214 : vector<2x256xf32>
      %253 = arith.addf %249, %252 : vector<2x256xf32>
      %254 = arith.addf %193, %253 : vector<2x256xf32>
      %c38 = arith.constant 38 : index
      %255 = memref.load %arg2[%c38] : memref<98xf32, #tpu.memory_space<smem>>
      %256 = vector.broadcast %255 : f32 to vector<2x256xf32>
      %257 = arith.mulf %256, %212 : vector<2x256xf32>
      %c87 = arith.constant 87 : index
      %258 = memref.load %arg2[%c87] : memref<98xf32, #tpu.memory_space<smem>>
      %259 = vector.broadcast %258 : f32 to vector<2x256xf32>
      %260 = arith.mulf %259, %214 : vector<2x256xf32>
      %261 = arith.addf %257, %260 : vector<2x256xf32>
      %262 = arith.addf %201, %261 : vector<2x256xf32>
      %c45 = arith.constant 45 : index
      %263 = memref.load %arg2[%c45] : memref<98xf32, #tpu.memory_space<smem>>
      %264 = vector.broadcast %263 : f32 to vector<2x256xf32>
      %265 = arith.mulf %264, %212 : vector<2x256xf32>
      %c94 = arith.constant 94 : index
      %266 = memref.load %arg2[%c94] : memref<98xf32, #tpu.memory_space<smem>>
      %267 = vector.broadcast %266 : f32 to vector<2x256xf32>
      %268 = arith.mulf %267, %214 : vector<2x256xf32>
      %269 = arith.addf %265, %268 : vector<2x256xf32>
      %270 = arith.addf %209, %269 : vector<2x256xf32>
      %c4 = arith.constant 4 : index
      %c0_28 = arith.constant 0 : index
      %271 = vector.load %arg4[%c4, %c0_28] : memref<7x256xf32, #tpu.memory_space<vmem>>, vector<1x256xf32>
      %cst_29 = arith.constant 0.000000e+00 : f32
      %272 = vector.broadcast %cst_29 : f32 to vector<2x1xf32>
      %273 = vector.extract_strided_slice %14 {offsets = [0, 1], sizes = [2, 255], strides = [1, 1]} : vector<2x256xf32> to vector<2x255xf32>
      %274 = tpu.concatenate %273, %272 in 1 : vector<2x255xf32>, vector<2x1xf32> -> vector<2x256xf32>
      %275 = vector.broadcast %271 : vector<1x256xf32> to vector<2x256xf32>
      %276 = arith.mulf %274, %275 : vector<2x256xf32>
      %cst_30 = arith.constant 0.000000e+00 : f32
      %277 = vector.broadcast %cst_30 : f32 to vector<2x1xf32>
      %278 = vector.extract_strided_slice %15 {offsets = [0, 1], sizes = [2, 255], strides = [1, 1]} : vector<2x256xf32> to vector<2x255xf32>
      %279 = tpu.concatenate %278, %277 in 1 : vector<2x255xf32>, vector<2x1xf32> -> vector<2x256xf32>
      %280 = vector.broadcast %271 : vector<1x256xf32> to vector<2x256xf32>
      %281 = arith.mulf %279, %280 : vector<2x256xf32>
      %c4_31 = arith.constant 4 : index
      %282 = memref.load %arg2[%c4_31] : memref<98xf32, #tpu.memory_space<smem>>
      %283 = vector.broadcast %282 : f32 to vector<2x256xf32>
      %284 = arith.mulf %283, %276 : vector<2x256xf32>
      %c53 = arith.constant 53 : index
      %285 = memref.load %arg2[%c53] : memref<98xf32, #tpu.memory_space<smem>>
      %286 = vector.broadcast %285 : f32 to vector<2x256xf32>
      %287 = arith.mulf %286, %281 : vector<2x256xf32>
      %288 = arith.addf %284, %287 : vector<2x256xf32>
      %289 = arith.addf %222, %288 : vector<2x256xf32>
      %c11 = arith.constant 11 : index
      %290 = memref.load %arg2[%c11] : memref<98xf32, #tpu.memory_space<smem>>
      %291 = vector.broadcast %290 : f32 to vector<2x256xf32>
      %292 = arith.mulf %291, %276 : vector<2x256xf32>
      %c60 = arith.constant 60 : index
      %293 = memref.load %arg2[%c60] : memref<98xf32, #tpu.memory_space<smem>>
      %294 = vector.broadcast %293 : f32 to vector<2x256xf32>
      %295 = arith.mulf %294, %281 : vector<2x256xf32>
      %296 = arith.addf %292, %295 : vector<2x256xf32>
      %297 = arith.addf %230, %296 : vector<2x256xf32>
      %c18 = arith.constant 18 : index
      %298 = memref.load %arg2[%c18] : memref<98xf32, #tpu.memory_space<smem>>
      %299 = vector.broadcast %298 : f32 to vector<2x256xf32>
      %300 = arith.mulf %299, %276 : vector<2x256xf32>
      %c67 = arith.constant 67 : index
      %301 = memref.load %arg2[%c67] : memref<98xf32, #tpu.memory_space<smem>>
      %302 = vector.broadcast %301 : f32 to vector<2x256xf32>
      %303 = arith.mulf %302, %281 : vector<2x256xf32>
      %304 = arith.addf %300, %303 : vector<2x256xf32>
      %305 = arith.addf %238, %304 : vector<2x256xf32>
      %c25 = arith.constant 25 : index
      %306 = memref.load %arg2[%c25] : memref<98xf32, #tpu.memory_space<smem>>
      %307 = vector.broadcast %306 : f32 to vector<2x256xf32>
      %308 = arith.mulf %307, %276 : vector<2x256xf32>
      %c74 = arith.constant 74 : index
      %309 = memref.load %arg2[%c74] : memref<98xf32, #tpu.memory_space<smem>>
      %310 = vector.broadcast %309 : f32 to vector<2x256xf32>
      %311 = arith.mulf %310, %281 : vector<2x256xf32>
      %312 = arith.addf %308, %311 : vector<2x256xf32>
      %313 = arith.addf %246, %312 : vector<2x256xf32>
      %c32 = arith.constant 32 : index
      %314 = memref.load %arg2[%c32] : memref<98xf32, #tpu.memory_space<smem>>
      %315 = vector.broadcast %314 : f32 to vector<2x256xf32>
      %316 = arith.mulf %315, %276 : vector<2x256xf32>
      %c81 = arith.constant 81 : index
      %317 = memref.load %arg2[%c81] : memref<98xf32, #tpu.memory_space<smem>>
      %318 = vector.broadcast %317 : f32 to vector<2x256xf32>
      %319 = arith.mulf %318, %281 : vector<2x256xf32>
      %320 = arith.addf %316, %319 : vector<2x256xf32>
      %321 = arith.addf %254, %320 : vector<2x256xf32>
      %c39 = arith.constant 39 : index
      %322 = memref.load %arg2[%c39] : memref<98xf32, #tpu.memory_space<smem>>
      %323 = vector.broadcast %322 : f32 to vector<2x256xf32>
      %324 = arith.mulf %323, %276 : vector<2x256xf32>
      %c88 = arith.constant 88 : index
      %325 = memref.load %arg2[%c88] : memref<98xf32, #tpu.memory_space<smem>>
      %326 = vector.broadcast %325 : f32 to vector<2x256xf32>
      %327 = arith.mulf %326, %281 : vector<2x256xf32>
      %328 = arith.addf %324, %327 : vector<2x256xf32>
      %329 = arith.addf %262, %328 : vector<2x256xf32>
      %c46 = arith.constant 46 : index
      %330 = memref.load %arg2[%c46] : memref<98xf32, #tpu.memory_space<smem>>
      %331 = vector.broadcast %330 : f32 to vector<2x256xf32>
      %332 = arith.mulf %331, %276 : vector<2x256xf32>
      %c95 = arith.constant 95 : index
      %333 = memref.load %arg2[%c95] : memref<98xf32, #tpu.memory_space<smem>>
      %334 = vector.broadcast %333 : f32 to vector<2x256xf32>
      %335 = arith.mulf %334, %281 : vector<2x256xf32>
      %336 = arith.addf %332, %335 : vector<2x256xf32>
      %337 = arith.addf %270, %336 : vector<2x256xf32>
      %c5 = arith.constant 5 : index
      %c0_32 = arith.constant 0 : index
      %338 = vector.load %arg4[%c5, %c0_32] : memref<7x256xf32, #tpu.memory_space<vmem>>, vector<1x256xf32>
      %cst_33 = arith.constant 0.000000e+00 : f32
      %339 = vector.broadcast %cst_33 : f32 to vector<2x2xf32>
      %340 = vector.extract_strided_slice %14 {offsets = [0, 2], sizes = [2, 254], strides = [1, 1]} : vector<2x256xf32> to vector<2x254xf32>
      %341 = tpu.concatenate %340, %339 in 1 : vector<2x254xf32>, vector<2x2xf32> -> vector<2x256xf32>
      %342 = vector.broadcast %338 : vector<1x256xf32> to vector<2x256xf32>
      %343 = arith.mulf %341, %342 : vector<2x256xf32>
      %cst_34 = arith.constant 0.000000e+00 : f32
      %344 = vector.broadcast %cst_34 : f32 to vector<2x2xf32>
      %345 = vector.extract_strided_slice %15 {offsets = [0, 2], sizes = [2, 254], strides = [1, 1]} : vector<2x256xf32> to vector<2x254xf32>
      %346 = tpu.concatenate %345, %344 in 1 : vector<2x254xf32>, vector<2x2xf32> -> vector<2x256xf32>
      %347 = vector.broadcast %338 : vector<1x256xf32> to vector<2x256xf32>
      %348 = arith.mulf %346, %347 : vector<2x256xf32>
      %c5_35 = arith.constant 5 : index
      %349 = memref.load %arg2[%c5_35] : memref<98xf32, #tpu.memory_space<smem>>
      %350 = vector.broadcast %349 : f32 to vector<2x256xf32>
      %351 = arith.mulf %350, %343 : vector<2x256xf32>
      %c54 = arith.constant 54 : index
      %352 = memref.load %arg2[%c54] : memref<98xf32, #tpu.memory_space<smem>>
      %353 = vector.broadcast %352 : f32 to vector<2x256xf32>
      %354 = arith.mulf %353, %348 : vector<2x256xf32>
      %355 = arith.addf %351, %354 : vector<2x256xf32>
      %356 = arith.addf %289, %355 : vector<2x256xf32>
      %c12 = arith.constant 12 : index
      %357 = memref.load %arg2[%c12] : memref<98xf32, #tpu.memory_space<smem>>
      %358 = vector.broadcast %357 : f32 to vector<2x256xf32>
      %359 = arith.mulf %358, %343 : vector<2x256xf32>
      %c61 = arith.constant 61 : index
      %360 = memref.load %arg2[%c61] : memref<98xf32, #tpu.memory_space<smem>>
      %361 = vector.broadcast %360 : f32 to vector<2x256xf32>
      %362 = arith.mulf %361, %348 : vector<2x256xf32>
      %363 = arith.addf %359, %362 : vector<2x256xf32>
      %364 = arith.addf %297, %363 : vector<2x256xf32>
      %c19 = arith.constant 19 : index
      %365 = memref.load %arg2[%c19] : memref<98xf32, #tpu.memory_space<smem>>
      %366 = vector.broadcast %365 : f32 to vector<2x256xf32>
      %367 = arith.mulf %366, %343 : vector<2x256xf32>
      %c68 = arith.constant 68 : index
      %368 = memref.load %arg2[%c68] : memref<98xf32, #tpu.memory_space<smem>>
      %369 = vector.broadcast %368 : f32 to vector<2x256xf32>
      %370 = arith.mulf %369, %348 : vector<2x256xf32>
      %371 = arith.addf %367, %370 : vector<2x256xf32>
      %372 = arith.addf %305, %371 : vector<2x256xf32>
      %c26 = arith.constant 26 : index
      %373 = memref.load %arg2[%c26] : memref<98xf32, #tpu.memory_space<smem>>
      %374 = vector.broadcast %373 : f32 to vector<2x256xf32>
      %375 = arith.mulf %374, %343 : vector<2x256xf32>
      %c75 = arith.constant 75 : index
      %376 = memref.load %arg2[%c75] : memref<98xf32, #tpu.memory_space<smem>>
      %377 = vector.broadcast %376 : f32 to vector<2x256xf32>
      %378 = arith.mulf %377, %348 : vector<2x256xf32>
      %379 = arith.addf %375, %378 : vector<2x256xf32>
      %380 = arith.addf %313, %379 : vector<2x256xf32>
      %c33 = arith.constant 33 : index
      %381 = memref.load %arg2[%c33] : memref<98xf32, #tpu.memory_space<smem>>
      %382 = vector.broadcast %381 : f32 to vector<2x256xf32>
      %383 = arith.mulf %382, %343 : vector<2x256xf32>
      %c82 = arith.constant 82 : index
      %384 = memref.load %arg2[%c82] : memref<98xf32, #tpu.memory_space<smem>>
      %385 = vector.broadcast %384 : f32 to vector<2x256xf32>
      %386 = arith.mulf %385, %348 : vector<2x256xf32>
      %387 = arith.addf %383, %386 : vector<2x256xf32>
      %388 = arith.addf %321, %387 : vector<2x256xf32>
      %c40 = arith.constant 40 : index
      %389 = memref.load %arg2[%c40] : memref<98xf32, #tpu.memory_space<smem>>
      %390 = vector.broadcast %389 : f32 to vector<2x256xf32>
      %391 = arith.mulf %390, %343 : vector<2x256xf32>
      %c89 = arith.constant 89 : index
      %392 = memref.load %arg2[%c89] : memref<98xf32, #tpu.memory_space<smem>>
      %393 = vector.broadcast %392 : f32 to vector<2x256xf32>
      %394 = arith.mulf %393, %348 : vector<2x256xf32>
      %395 = arith.addf %391, %394 : vector<2x256xf32>
      %396 = arith.addf %329, %395 : vector<2x256xf32>
      %c47 = arith.constant 47 : index
      %397 = memref.load %arg2[%c47] : memref<98xf32, #tpu.memory_space<smem>>
      %398 = vector.broadcast %397 : f32 to vector<2x256xf32>
      %399 = arith.mulf %398, %343 : vector<2x256xf32>
      %c96 = arith.constant 96 : index
      %400 = memref.load %arg2[%c96] : memref<98xf32, #tpu.memory_space<smem>>
      %401 = vector.broadcast %400 : f32 to vector<2x256xf32>
      %402 = arith.mulf %401, %348 : vector<2x256xf32>
      %403 = arith.addf %399, %402 : vector<2x256xf32>
      %404 = arith.addf %337, %403 : vector<2x256xf32>
      %c6 = arith.constant 6 : index
      %c0_36 = arith.constant 0 : index
      %405 = vector.load %arg4[%c6, %c0_36] : memref<7x256xf32, #tpu.memory_space<vmem>>, vector<1x256xf32>
      %cst_37 = arith.constant 0.000000e+00 : f32
      %406 = vector.broadcast %cst_37 : f32 to vector<2x3xf32>
      %407 = vector.extract_strided_slice %14 {offsets = [0, 3], sizes = [2, 253], strides = [1, 1]} : vector<2x256xf32> to vector<2x253xf32>
      %408 = tpu.concatenate %407, %406 in 1 : vector<2x253xf32>, vector<2x3xf32> -> vector<2x256xf32>
      %409 = vector.broadcast %405 : vector<1x256xf32> to vector<2x256xf32>
      %410 = arith.mulf %408, %409 : vector<2x256xf32>
      %cst_38 = arith.constant 0.000000e+00 : f32
      %411 = vector.broadcast %cst_38 : f32 to vector<2x3xf32>
      %412 = vector.extract_strided_slice %15 {offsets = [0, 3], sizes = [2, 253], strides = [1, 1]} : vector<2x256xf32> to vector<2x253xf32>
      %413 = tpu.concatenate %412, %411 in 1 : vector<2x253xf32>, vector<2x3xf32> -> vector<2x256xf32>
      %414 = vector.broadcast %405 : vector<1x256xf32> to vector<2x256xf32>
      %415 = arith.mulf %413, %414 : vector<2x256xf32>
      %c6_39 = arith.constant 6 : index
      %416 = memref.load %arg2[%c6_39] : memref<98xf32, #tpu.memory_space<smem>>
      %417 = vector.broadcast %416 : f32 to vector<2x256xf32>
      %418 = arith.mulf %417, %410 : vector<2x256xf32>
      %c55 = arith.constant 55 : index
      %419 = memref.load %arg2[%c55] : memref<98xf32, #tpu.memory_space<smem>>
      %420 = vector.broadcast %419 : f32 to vector<2x256xf32>
      %421 = arith.mulf %420, %415 : vector<2x256xf32>
      %422 = arith.addf %418, %421 : vector<2x256xf32>
      %423 = arith.addf %356, %422 : vector<2x256xf32>
      %c13 = arith.constant 13 : index
      %424 = memref.load %arg2[%c13] : memref<98xf32, #tpu.memory_space<smem>>
      %425 = vector.broadcast %424 : f32 to vector<2x256xf32>
      %426 = arith.mulf %425, %410 : vector<2x256xf32>
      %c62 = arith.constant 62 : index
      %427 = memref.load %arg2[%c62] : memref<98xf32, #tpu.memory_space<smem>>
      %428 = vector.broadcast %427 : f32 to vector<2x256xf32>
      %429 = arith.mulf %428, %415 : vector<2x256xf32>
      %430 = arith.addf %426, %429 : vector<2x256xf32>
      %431 = arith.addf %364, %430 : vector<2x256xf32>
      %c20 = arith.constant 20 : index
      %432 = memref.load %arg2[%c20] : memref<98xf32, #tpu.memory_space<smem>>
      %433 = vector.broadcast %432 : f32 to vector<2x256xf32>
      %434 = arith.mulf %433, %410 : vector<2x256xf32>
      %c69 = arith.constant 69 : index
      %435 = memref.load %arg2[%c69] : memref<98xf32, #tpu.memory_space<smem>>
      %436 = vector.broadcast %435 : f32 to vector<2x256xf32>
      %437 = arith.mulf %436, %415 : vector<2x256xf32>
      %438 = arith.addf %434, %437 : vector<2x256xf32>
      %439 = arith.addf %372, %438 : vector<2x256xf32>
      %c27 = arith.constant 27 : index
      %440 = memref.load %arg2[%c27] : memref<98xf32, #tpu.memory_space<smem>>
      %441 = vector.broadcast %440 : f32 to vector<2x256xf32>
      %442 = arith.mulf %441, %410 : vector<2x256xf32>
      %c76 = arith.constant 76 : index
      %443 = memref.load %arg2[%c76] : memref<98xf32, #tpu.memory_space<smem>>
      %444 = vector.broadcast %443 : f32 to vector<2x256xf32>
      %445 = arith.mulf %444, %415 : vector<2x256xf32>
      %446 = arith.addf %442, %445 : vector<2x256xf32>
      %447 = arith.addf %380, %446 : vector<2x256xf32>
      %c34 = arith.constant 34 : index
      %448 = memref.load %arg2[%c34] : memref<98xf32, #tpu.memory_space<smem>>
      %449 = vector.broadcast %448 : f32 to vector<2x256xf32>
      %450 = arith.mulf %449, %410 : vector<2x256xf32>
      %c83 = arith.constant 83 : index
      %451 = memref.load %arg2[%c83] : memref<98xf32, #tpu.memory_space<smem>>
      %452 = vector.broadcast %451 : f32 to vector<2x256xf32>
      %453 = arith.mulf %452, %415 : vector<2x256xf32>
      %454 = arith.addf %450, %453 : vector<2x256xf32>
      %455 = arith.addf %388, %454 : vector<2x256xf32>
      %c41 = arith.constant 41 : index
      %456 = memref.load %arg2[%c41] : memref<98xf32, #tpu.memory_space<smem>>
      %457 = vector.broadcast %456 : f32 to vector<2x256xf32>
      %458 = arith.mulf %457, %410 : vector<2x256xf32>
      %c90 = arith.constant 90 : index
      %459 = memref.load %arg2[%c90] : memref<98xf32, #tpu.memory_space<smem>>
      %460 = vector.broadcast %459 : f32 to vector<2x256xf32>
      %461 = arith.mulf %460, %415 : vector<2x256xf32>
      %462 = arith.addf %458, %461 : vector<2x256xf32>
      %463 = arith.addf %396, %462 : vector<2x256xf32>
      %c48 = arith.constant 48 : index
      %464 = memref.load %arg2[%c48] : memref<98xf32, #tpu.memory_space<smem>>
      %465 = vector.broadcast %464 : f32 to vector<2x256xf32>
      %466 = arith.mulf %465, %410 : vector<2x256xf32>
      %c97 = arith.constant 97 : index
      %467 = memref.load %arg2[%c97] : memref<98xf32, #tpu.memory_space<smem>>
      %468 = vector.broadcast %467 : f32 to vector<2x256xf32>
      %469 = arith.mulf %468, %415 : vector<2x256xf32>
      %470 = arith.addf %466, %469 : vector<2x256xf32>
      %471 = arith.addf %404, %470 : vector<2x256xf32>
      %c0_40 = arith.constant 0 : index
      %472 = memref.load %arg3[%c0_40] : memref<1xf32, #tpu.memory_space<smem>>
      %473 = vector.broadcast %472 : f32 to vector<2x256xf32>
      %cst_41 = arith.constant 0.000000e+00 : f32
      %474 = vector.broadcast %cst_41 : f32 to vector<2x48xf32>
      %475 = vector.extract_strided_slice %423 {offsets = [0, 0], sizes = [2, 208], strides = [1, 1]} : vector<2x256xf32> to vector<2x208xf32>
      %476 = tpu.concatenate %474, %475 in 1 : vector<2x48xf32>, vector<2x208xf32> -> vector<2x256xf32>
      %477 = arith.addf %473, %476 : vector<2x256xf32>
      %cst_42 = arith.constant 0.000000e+00 : f32
      %478 = vector.broadcast %cst_42 : f32 to vector<2x32xf32>
      %479 = vector.extract_strided_slice %431 {offsets = [0, 0], sizes = [2, 224], strides = [1, 1]} : vector<2x256xf32> to vector<2x224xf32>
      %480 = tpu.concatenate %478, %479 in 1 : vector<2x32xf32>, vector<2x224xf32> -> vector<2x256xf32>
      %481 = arith.addf %477, %480 : vector<2x256xf32>
      %cst_43 = arith.constant 0.000000e+00 : f32
      %482 = vector.broadcast %cst_43 : f32 to vector<2x16xf32>
      %483 = vector.extract_strided_slice %439 {offsets = [0, 0], sizes = [2, 240], strides = [1, 1]} : vector<2x256xf32> to vector<2x240xf32>
      %484 = tpu.concatenate %482, %483 in 1 : vector<2x16xf32>, vector<2x240xf32> -> vector<2x256xf32>
      %485 = arith.addf %481, %484 : vector<2x256xf32>
      %486 = arith.addf %485, %447 : vector<2x256xf32>
      %cst_44 = arith.constant 0.000000e+00 : f32
      %487 = vector.broadcast %cst_44 : f32 to vector<2x16xf32>
      %488 = vector.extract_strided_slice %455 {offsets = [0, 16], sizes = [2, 240], strides = [1, 1]} : vector<2x256xf32> to vector<2x240xf32>
      %489 = tpu.concatenate %488, %487 in 1 : vector<2x240xf32>, vector<2x16xf32> -> vector<2x256xf32>
      %490 = arith.addf %486, %489 : vector<2x256xf32>
      %cst_45 = arith.constant 0.000000e+00 : f32
      %491 = vector.broadcast %cst_45 : f32 to vector<2x32xf32>
      %492 = vector.extract_strided_slice %463 {offsets = [0, 32], sizes = [2, 224], strides = [1, 1]} : vector<2x256xf32> to vector<2x224xf32>
      %493 = tpu.concatenate %492, %491 in 1 : vector<2x224xf32>, vector<2x32xf32> -> vector<2x256xf32>
      %494 = arith.addf %490, %493 : vector<2x256xf32>
      %cst_46 = arith.constant 0.000000e+00 : f32
      %495 = vector.broadcast %cst_46 : f32 to vector<2x48xf32>
      %496 = vector.extract_strided_slice %471 {offsets = [0, 48], sizes = [2, 208], strides = [1, 1]} : vector<2x256xf32> to vector<2x208xf32>
      %497 = tpu.concatenate %496, %495 in 1 : vector<2x208xf32>, vector<2x48xf32> -> vector<2x256xf32>
      %498 = arith.addf %494, %497 : vector<2x256xf32>
      %499 = arith.negf %498 : vector<2x256xf32>
      %500 = math.exp %499 : vector<2x256xf32>
      %cst_47 = arith.constant 1.000000e+00 : f32
      %501 = vector.broadcast %cst_47 : f32 to vector<2x256xf32>
      %502 = arith.addf %501, %500 : vector<2x256xf32>
      %503 = arith.divf %501, %502 : vector<2x256xf32>
      %c0_48 = arith.constant 0 : index
      %c0_49 = arith.constant 0 : index
      %504 = vector.load %arg6[%c0_48, %c0_49] : memref<2x256xf32, #tpu.memory_space<vmem>>, vector<2x256xf32>
      tpu.vector_store %arg6[%c0_48, %c0_49], %503 {strides = array<i32>} : memref<2x256xf32, #tpu.memory_space<vmem>>, vector<2x256xf32>,
    } else {
    }
    return
  }
  func.func @transform_0(%arg0: i32, %arg1: i32) -> i32 {
    %c0_i32 = arith.constant 0 : i32
    %c0_i32_0 = arith.constant 0 : i32
    return %c0_i32 : i32
  }
  func.func @transform_1(%arg0: i32, %arg1: i32) -> i32 {
    %c0_i32 = arith.constant 0 : i32
    %c0_i32_0 = arith.constant 0 : i32
    return %c0_i32 : i32
  }
  func.func @transform_2(%arg0: i32, %arg1: i32) -> (i32, i32) {
    %c0_i32 = arith.constant 0 : i32
    %c0_i32_0 = arith.constant 0 : i32
    %c0_i32_1 = arith.constant 0 : i32
    return %c0_i32, %c0_i32_0 : i32, i32
  }
  func.func @transform_3(%arg0: i32, %arg1: i32) -> (i32, i32, i32) {
    %c0_i32 = arith.constant 0 : i32
    %c0_i32_0 = arith.constant 0 : i32
    return %arg0, %arg1, %c0_i32 : i32, i32, i32
  }
  func.func @transform_4(%arg0: i32, %arg1: i32) -> (i32, i32) {
    %c0_i32 = arith.constant 0 : i32
    %c0_i32_0 = arith.constant 0 : i32
    return %arg0, %c0_i32 : i32, i32
  }
}

</mosaic_0001>

<llo_original>
// kernel: tpu_custom_call.1
$region0: #{tpu_custom_call.1}
  #allocation0 [shape = 'u32[]', space=smem, size = 0x4, offset = 0x4, fixed_abs, tag = 'smem constant byte address 0x4 - core index']
  #allocation1 [shape = 'u32[72,128]{1,0:T(1,128)}', space=vmem, size = 0x9000, scoped, tag = 'internal scratch']
  #allocation2 [shape = 'f32[2,256]{1,0:T(2,128)}', space=vmem, size = 0x800, scoped, tag = 'scratch operand']
  #allocation3 [shape = 'f32[2,256]{1,0:T(2,128)}', space=vmem, size = 0x800, scoped, tag = 'scratch operand']
  #allocation4 [shape = 'f32[1]{0:T(128)S(6)}', space=smem, size = 0x200, scoped, tag = 'scoped memory for tpu_custom_call.1']
  %s0 = inlined_call_operand.vmem [shape: f32[98], index: 0, kind: input, shape index: {}]
  %s1 = inlined_call_operand.<no memory space> [shape: f32[1], index: 1, kind: input, shape index: {}]
  %s2 = inlined_call_operand.hbm [shape: f32[7,256], index: 2, kind: input, shape index: {}]
  %s3 = inlined_call_operand.hbm [shape: f32[2,4,256], index: 3, kind: input, shape index: {}]
  %s4 = inlined_call_operand.hbm [shape: f32[2,256], index: 4, kind: output, shape index: {}]
  %s5 = sld [smem:[#allocation0]]
  $region50: #{tpu_custom_call.1} parent=0
    _
  %s7 = ssub.s32 1, %s5
  %s8 = scalar_select 0, %s7, %s5
  %9 = sst [smem:[#allocation4]] %s1
  $region1: #{tpu_custom_call.1} parent=0
    #allocation5 [shape = 'u8[512]{0}', space=smem, size = 0x200, scoped, tag = 'input window, operand 0, single buffered']
    #allocation6 [shape = 's32[1]{0}', space=sflag, size = 0x4, scoped, tag = 'scoped memory for tpu_custom_call.1']
    #allocation7 [shape = 's32[1]{0}', space=sflag, size = 0x4, scoped, tag = 'scoped memory for tpu_custom_call.1']
    #allocation8 [shape = 's32[1]{0}', space=sflag, size = 0x4, scoped, tag = 'scoped memory for tpu_custom_call.1']
    #allocation9 [shape = 'u8[8192]{0}', space=vmem, size = 0x2000, scoped, tag = 'input window, operand 2, single buffered']
    #allocation10 [shape = 'u8[8192]{0}', space=vmem, size = 0x2000, scoped, tag = 'input window, operand 3, single buffered']
    #allocation11 [shape = 's32[1]{0}', space=sflag, size = 0x4, scoped, tag = 'scoped memory for tpu_custom_call.1']
    #allocation12 [shape = 'u8[2048]{0}', space=vmem, size = 0x800, scoped, tag = 'output window, operand 0, single buffered']
    %10 = vsyncpa [#allocation8], 0
    %11 = vsyncpa [#allocation6], 0
    %12 = vsyncpa [#allocation11], 0
    %13 = vsyncpa [#allocation7], 0
    // Predicated region
    $region2: #{tpu_custom_call.1} parent=1 // pred_check
      _
    $region3: #{tpu_custom_call.1} parent=1 // pred_check_branch
      %15 = sbr.rel (0) target = $region5
    $region4: #{tpu_custom_call.1} parent=1 // pred_region
      %17 = vsyncadd [#allocation8], 0
      %s19 = sshll.u32 %s0, 4
      %s20 = int_to_ptr.vmem [resolvable:$true] %s19
      %22 = dma.vmem_to_smem %s20, 16, [#allocation5], [#allocation8]
    $region5: #{tpu_custom_call.1} parent=1 // pred_fallthru
      _
    // Predicated region
    $region6: #{tpu_custom_call.1} parent=1 // pred_check
      _
    $region7: #{tpu_custom_call.1} parent=1 // pred_check_branch
      %24 = sbr.rel (0) target = $region9
    $region8: #{tpu_custom_call.1} parent=1 // pred_region
      _
    $region9: #{tpu_custom_call.1} parent=1 // pred_fallthru
      _
    // Predicated region
    $region10: #{tpu_custom_call.1} parent=1 // pred_check
      _
    $region11: #{tpu_custom_call.1} parent=1 // pred_check_branch
      %26 = sbr.rel (0) target = $region13
    $region12: #{tpu_custom_call.1} parent=1 // pred_region
      %28 = vsyncadd [#allocation6], 0
      %s30 = sshll.u32 %s2, 4
      %s31 = int_to_ptr.hbm [resolvable:$true] %s30
      %s32 = sshll.u32 [#allocation9], 4
      %s33 = int_to_ptr.vmem [resolvable:$true] %s32
      %35 = dma.hbm_to_vmem [thread:$0]  %s31, 256, %s33, [#allocation6]
    $region13: #{tpu_custom_call.1} parent=1 // pred_fallthru
      _
    // Predicated region
    $region14: #{tpu_custom_call.1} parent=1 // pred_check
      _
    $region15: #{tpu_custom_call.1} parent=1 // pred_check_branch
      %37 = sbr.rel (0) target = $region17
    $region16: #{tpu_custom_call.1} parent=1 // pred_region
      %39 = vsyncadd [#allocation11], 0
      %s40 = sshll.u32 %s3, 4
      %s41 = int_to_ptr.hbm [resolvable:$true] %s40
      %s42 = sshll.u32 [#allocation10], 4
      %s43 = int_to_ptr.vmem [resolvable:$true] %s42
      %48 = dma.hbm_to_vmem [thread:$0]  %s41, 256, %s43, [#allocation11], 128, 128, 8
    $region17: #{tpu_custom_call.1} parent=1 // pred_fallthru
      _
    // Predicated region
    $region18: #{tpu_custom_call.1} parent=1 // pred_check
      _
    $region19: #{tpu_custom_call.1} parent=1 // pred_check_branch
      %50 = sbr.rel (0) target = $region21
    $region20: #{tpu_custom_call.1} parent=1 // pred_region
      %52 = dma.done [#allocation8], 16
    $region21: #{tpu_custom_call.1} parent=1 // pred_fallthru
      _
    // Predicated region
    $region22: #{tpu_custom_call.1} parent=1 // pred_check
      _
    $region23: #{tpu_custom_call.1} parent=1 // pred_check_branch
      %54 = sbr.rel (0) target = $region25
    $region24: #{tpu_custom_call.1} parent=1 // pred_region
      %56 = dma.done [#allocation6], 256
    $region25: #{tpu_custom_call.1} parent=1 // pred_fallthru
      _
    // Predicated region
    $region26: #{tpu_custom_call.1} parent=1 // pred_check
      _
    $region27: #{tpu_custom_call.1} parent=1 // pred_check_branch
      %58 = sbr.rel (0) target = $region29
    $region28: #{tpu_custom_call.1} parent=1 // pred_region
      %60 = dma.done [#allocation11], 256
    $region29: #{tpu_custom_call.1} parent=1 // pred_fallthru
      _
    %61 = sfence
    %v62 = vld [vmem:[#allocation10] sm:$0xff]
    %v63 = vld [vmem:[#allocation10 + $0x8] sm:$0xff]
    %66 = vst [vmem:[#allocation1] ss:$2 sm:$0xff] %v62
    %v67 = vld.sshfl [vmem:[#allocation1] sm:$0xff pattern:$0x75316420]
    %v68 = vld.sshfl [vmem:[#allocation1 + $0x8] sm:$0xff pattern:$0x75316420]
    %s69 = scalar_lea.vmem [#allocation1], 16
    %70 = vst [vmem:[%s69] ss:$2 sm:$0xff] %v63
    %v71 = vld.sshfl [vmem:[#allocation1 + $0x10] sm:$0xff pattern:$0x75316420]
    %v72 = vld.sshfl [vmem:[#allocation1 + $0x18] sm:$0xff pattern:$0x75316420]
    %vm77 = vcmask 1043456
    %v78 = vsel %vm77, %v67, 0.0
    %v79 = vrot.slane %v78, 4
    %v80 = vadd.f32 %v78, %v79
    %v81 = vrot.slane %v80, 2
    %v82 = vadd.f32 %v80, %v81
    %v83 = vrot.slane %v82, 1
    %v84 = vadd.f32 %v82, %v83
    %v85 = vsel %vm77, %v68, 0.0
    %v86 = vrot.slane %v85, 4
    %v87 = vadd.f32 %v85, %v86
    %v88 = vrot.slane %v87, 2
    %v89 = vadd.f32 %v87, %v88
    %v90 = vrot.slane %v89, 1
    %v91 = vadd.f32 %v89, %v90
    %v92 = vsel %vm77, %v71, 0.0
    %v93 = vrot.slane %v92, 4
    %v94 = vadd.f32 %v92, %v93
    %v95 = vrot.slane %v94, 2
    %v96 = vadd.f32 %v94, %v95
    %v97 = vrot.slane %v96, 1
    %v98 = vadd.f32 %v96, %v97
    %v99 = vsel %vm77, %v72, 0.0
    %v100 = vrot.slane %v99, 4
    %v101 = vadd.f32 %v99, %v100
    %v102 = vrot.slane %v101, 2
    %v103 = vadd.f32 %v101, %v102
    %v104 = vrot.slane %v103, 1
    %v105 = vadd.f32 %v103, %v104
    %106 = vst [vmem:[#allocation1] ss:$2 sm:$0xff] %v62
    %v107 = vld.sshfl [vmem:[#allocation1] sm:$0xff pattern:$0x75316420]
    %v108 = vld.sshfl [vmem:[#allocation1 + $0x8] sm:$0xff pattern:$0x75316420]
    %s109 = scalar_lea.vmem [#allocation1], 16
    %110 = vst [vmem:[%s109] ss:$2 sm:$0xff] %v63
    %v111 = vld.sshfl [vmem:[#allocation1 + $0x10] sm:$0xff pattern:$0x75316420]
    %v112 = vld.sshfl [vmem:[#allocation1 + $0x18] sm:$0xff pattern:$0x75316420]
    %v117 = vsel %vm77, %v107, -inf
    %v118 = vrot.slane %v117, 4
    %v119 = vmax.f32 %v117, %v118
    %v120 = vrot.slane %v119, 2
    %v121 = vmax.f32 %v119, %v120
    %v122 = vrot.slane %v121, 1
    %v123 = vmax.f32 %v121, %v122
    %v124 = vsel %vm77, %v108, -inf
    %v125 = vrot.slane %v124, 4
    %v126 = vmax.f32 %v124, %v125
    %v127 = vrot.slane %v126, 2
    %v128 = vmax.f32 %v126, %v127
    %v129 = vrot.slane %v128, 1
    %v130 = vmax.f32 %v128, %v129
    %v131 = vsel %vm77, %v111, -inf
    %v132 = vrot.slane %v131, 4
    %v133 = vmax.f32 %v131, %v132
    %v134 = vrot.slane %v133, 2
    %v135 = vmax.f32 %v133, %v134
    %v136 = vrot.slane %v135, 1
    %v137 = vmax.f32 %v135, %v136
    %v138 = vsel %vm77, %v112, -inf
    %v139 = vrot.slane %v138, 4
    %v140 = vmax.f32 %v138, %v139
    %v141 = vrot.slane %v140, 2
    %v142 = vmax.f32 %v140, %v141
    %v143 = vrot.slane %v142, 1
    %v144 = vmax.f32 %v142, %v143
    %p145 = scmp.eq.s32.totalorder 0, 0
    // Predicated region
    $region30: #{tpu_custom_call.1} parent=1 // pred_check
      %p146 = pneg %p145
    $region31: #{tpu_custom_call.1} parent=1 // pred_check_branch
      %148 = sbr.rel (%p146) target = $region33
    $region32: #{tpu_custom_call.1} parent=1 // pred_region
      %v153 = vrot.slane %v91, 6
      %v154 = vrot.slane %v105, 6
      %vm155 = vcmask 1041408
      %v156 = vsel %vm155, %v84, %v153
      %v157 = vsel %vm155, %v98, %v154
      %vm158 = vcmask 1044484
      %v159 = vsel %vm158, %v156, %v156
      %vm160 = vcmask 1046534
      %v161 = vsel %vm160, %v156, %v159
      %v162 = vrot.slane %v157, 7
      %vm163 = vcmask 1041409
      %v164 = vsel %vm163, %v162, %v161
      %vm165 = vcmask 1043459
      %v166 = vsel %vm165, %v162, %v164
      %vm167 = vcmask 1045509
      %v168 = vsel %vm167, %v162, %v166
      %vm169 = vcmask 1047559
      %v170 = vsel %vm169, %v162, %v168
      %172 = vst [vmem:[#allocation2] sm:$0xf] %v170
      %v177 = vrot.slane %v130, 6
      %v178 = vrot.slane %v144, 6
      %v179 = vsel %vm155, %v123, %v177
      %v180 = vsel %vm155, %v137, %v178
      %v181 = vsel %vm158, %v179, %v179
      %v182 = vsel %vm160, %v179, %v181
      %v183 = vrot.slane %v180, 7
      %v184 = vsel %vm163, %v183, %v182
      %v185 = vsel %vm165, %v183, %v184
      %v186 = vsel %vm167, %v183, %v185
      %v187 = vsel %vm169, %v183, %v186
      %189 = vst [vmem:[#allocation3] sm:$0xf] %v187
    $region33: #{tpu_custom_call.1} parent=1 // pred_fallthru
      _
    %p190 = scmp.gt.s32.totalorder 0, 0
    // Predicated region
    $region34: #{tpu_custom_call.1} parent=1 // pred_check
      %p191 = pneg %p190
    $region35: #{tpu_custom_call.1} parent=1 // pred_check_branch
      %193 = sbr.rel (%p191) target = $region37
    $region36: #{tpu_custom_call.1} parent=1 // pred_region
      %v194 = vld [vmem:[#allocation2] sm:$0xf]
      %v199 = vrot.slane %v91, 6
      %v200 = vrot.slane %v105, 6
      %vm201 = vcmask 1041408
      %v202 = vsel %vm201, %v84, %v199
      %v203 = vsel %vm201, %v98, %v200
      %vm204 = vcmask 1044484
      %v205 = vsel %vm204, %v202, %v202
      %vm206 = vcmask 1046534
      %v207 = vsel %vm206, %v202, %v205
      %v208 = vrot.slane %v203, 7
      %vm209 = vcmask 1041409
      %v210 = vsel %vm209, %v208, %v207
      %vm211 = vcmask 1043459
      %v212 = vsel %vm211, %v208, %v210
      %vm213 = vcmask 1045509
      %v214 = vsel %vm213, %v208, %v212
      %vm215 = vcmask 1047559
      %v216 = vsel %vm215, %v208, %v214
      %v218 = vadd.f32 %v194, %v216
      %219 = vst [vmem:[#allocation2] sm:$0xf] %v218
      %v220 = vld [vmem:[#allocation3] sm:$0xf]
      %v225 = vrot.slane %v130, 6
      %v226 = vrot.slane %v144, 6
      %v227 = vsel %vm201, %v123, %v225
      %v228 = vsel %vm201, %v137, %v226
      %v229 = vsel %vm204, %v227, %v227
      %v230 = vsel %vm206, %v227, %v229
      %v231 = vrot.slane %v228, 7
      %v232 = vsel %vm209, %v231, %v230
      %v233 = vsel %vm211, %v231, %v232
      %v234 = vsel %vm213, %v231, %v233
      %v235 = vsel %vm215, %v231, %v234
      %v237 = vmax.f32 %v220, %v235
      %238 = vst [vmem:[#allocation3] sm:$0xf] %v237
    $region37: #{tpu_custom_call.1} parent=1 // pred_fallthru
      _
    // Predicated region
    $region38: #{tpu_custom_call.1} parent=1 // pred_check
      %p239 = pneg %p145
    $region39: #{tpu_custom_call.1} parent=1 // pred_check_branch
      %241 = sbr.rel (%p239) target = $region41
    $region40: #{tpu_custom_call.1} parent=1 // pred_region
      %v242 = vld [vmem:[#allocation2] sm:$0xf]
      %v243 = vmul.f32 %v242, 0.25
      %v244 = vld [vmem:[#allocation3] sm:$0xf]
      %v245 = vld [vmem:[#allocation9] ss:$8 sm:$0x3]
      %247 = vst [vmem:[#allocation1] ss:$4 sm:$0xff] %v243
      %v248 = vld.sshfl [vmem:[#allocation1] sm:$0xff pattern:$0x73625140]
      %v249 = vld.sshfl [vmem:[#allocation1 + $0x8] sm:$0xff pattern:$0x73625140]
      %250 = vrot.lane.b32.xlu0 %v248, 3
      %v251 = vpop.permute.xlu0 %250
      %252 = vrot.lane.b32.xlu0 %v249, 3
      %v253 = vpop.permute.xlu0 %252
      %vm254 = vcmask 23552
      %v255 = vsel %vm254, %v251, %v253
      %v258 = vsel %vm254, 0.0, %v251
      %v260 = vperm.slane %v245, 0
      %v261 = vperm.slane %v245, 1
      %v264 = vmul.f32 %v258, %v260
      %v265 = vmul.f32 %v255, %v261
      %267 = vst [vmem:[#allocation1] ss:$4 sm:$0xff] %v244
      %v268 = vld.sshfl [vmem:[#allocation1] sm:$0xff pattern:$0x73625140]
      %v269 = vld.sshfl [vmem:[#allocation1 + $0x8] sm:$0xff pattern:$0x73625140]
      %270 = vrot.lane.b32.xlu0 %v268, 3
      %v271 = vpop.permute.xlu0 %270
      %272 = vrot.lane.b32.xlu0 %v269, 3
      %v273 = vpop.permute.xlu0 %272
      %v274 = vsel %vm254, %v271, %v273
      %v277 = vsel %vm254, 0.0, %v271
      %v278 = vmul.f32 %v277, %v260
      %v279 = vmul.f32 %v274, %v261
      %s280 = sld [smem:[#allocation5]]
      %v281 = vstv %s280
      %v282 = vmul.f32 %v281, %v264
      %v283 = vmul.f32 %v281, %v265
      %s284 = sld [smem:[#allocation5 + $0x31]]
      %v285 = vstv %s284
      %v286 = vmul.f32 %v285, %v278
      %v287 = vmul.f32 %v285, %v279
      %v288 = vadd.f32 %v282, %v286
      %v289 = vadd.f32 %v283, %v287
      %s290 = sld [smem:[#allocation5 + $0x7]]
      %v291 = vstv %s290
      %v292 = vmul.f32 %v291, %v264
      %v293 = vmul.f32 %v291, %v265
      %s294 = sld [smem:[#allocation5 + $0x38]]
      %v295 = vstv %s294
      %v296 = vmul.f32 %v295, %v278
      %v297 = vmul.f32 %v295, %v279
      %v298 = vadd.f32 %v292, %v296
      %v299 = vadd.f32 %v293, %v297
      %s300 = sld [smem:[#allocation5 + $0xe]]
      %v301 = vstv %s300
      %v302 = vmul.f32 %v301, %v264
      %v303 = vmul.f32 %v301, %v265
      %s304 = sld [smem:[#allocation5 + $0x3f]]
      %v305 = vstv %s304
      %v306 = vmul.f32 %v305, %v278
      %v307 = vmul.f32 %v305, %v279
      %v308 = vadd.f32 %v302, %v306
      %v309 = vadd.f32 %v303, %v307
      %s310 = sld [smem:[#allocation5 + $0x15]]
      %v311 = vstv %s310
      %v312 = vmul.f32 %v311, %v264
      %v313 = vmul.f32 %v311, %v265
      %s314 = sld [smem:[#allocation5 + $0x46]]
      %v315 = vstv %s314
      %v316 = vmul.f32 %v315, %v278
      %v317 = vmul.f32 %v315, %v279
      %v318 = vadd.f32 %v312, %v316
      %v319 = vadd.f32 %v313, %v317
      %s320 = sld [smem:[#allocation5 + $0x1c]]
      %v321 = vstv %s320
      %v322 = vmul.f32 %v321, %v264
      %v323 = vmul.f32 %v321, %v265
      %s324 = sld [smem:[#allocation5 + $0x4d]]
      %v325 = vstv %s324
      %v326 = vmul.f32 %v325, %v278
      %v327 = vmul.f32 %v325, %v279
      %v328 = vadd.f32 %v322, %v326
      %v329 = vadd.f32 %v323, %v327
      %s330 = sld [smem:[#allocation5 + $0x23]]
      %v331 = vstv %s330
      %v332 = vmul.f32 %v331, %v264
      %v333 = vmul.f32 %v331, %v265
      %s334 = sld [smem:[#allocation5 + $0x54]]
      %v335 = vstv %s334
      %v336 = vmul.f32 %v335, %v278
      %v337 = vmul.f32 %v335, %v279
      %v338 = vadd.f32 %v332, %v336
      %v339 = vadd.f32 %v333, %v337
      %s340 = sld [smem:[#allocation5 + $0x2a]]
      %v341 = vstv %s340
      %v342 = vmul.f32 %v341, %v264
      %v343 = vmul.f32 %v341, %v265
      %s344 = sld [smem:[#allocation5 + $0x5b]]
      %v345 = vstv %s344
      %v346 = vmul.f32 %v345, %v278
      %v347 = vmul.f32 %v345, %v279
      %v348 = vadd.f32 %v342, %v346
      %v349 = vadd.f32 %v343, %v347
      %s350 = scalar_lea.vmem [#allocation9], 1
      %v351 = vld [vmem:[%s350] ss:$8 sm:$0x3]
      %352 = vst [vmem:[#allocation1] ss:$4 sm:$0xff] %v243
      %v353 = vld.sshfl [vmem:[#allocation1] sm:$0xff pattern:$0x73625140]
      %v354 = vld.sshfl [vmem:[#allocation1 + $0x8] sm:$0xff pattern:$0x73625140]
      %355 = vrot.lane.b32.xlu0 %v353, 2
      %v356 = vpop.permute.xlu0 %355
      %357 = vrot.lane.b32.xlu0 %v354, 2
      %v358 = vpop.permute.xlu0 %357
      %vm359 = vcmask 15360
      %v360 = vsel %vm359, %v356, %v358
      %v363 = vsel %vm359, 0.0, %v356
      %v365 = vperm.slane %v351, 0
      %v366 = vperm.slane %v351, 1
      %v369 = vmul.f32 %v363, %v365
      %v370 = vmul.f32 %v360, %v366
      %371 = vst [vmem:[#allocation1] ss:$4 sm:$0xff] %v244
      %v372 = vld.sshfl [vmem:[#allocation1] sm:$0xff pattern:$0x73625140]
      %v373 = vld.sshfl [vmem:[#allocation1 + $0x8] sm:$0xff pattern:$0x73625140]
      %374 = vrot.lane.b32.xlu0 %v372, 2
      %v375 = vpop.permute.xlu0 %374
      %376 = vrot.lane.b32.xlu0 %v373, 2
      %v377 = vpop.permute.xlu0 %376
      %v378 = vsel %vm359, %v375, %v377
      %v381 = vsel %vm359, 0.0, %v375
      %v382 = vmul.f32 %v381, %v365
      %v383 = vmul.f32 %v378, %v366
      %s384 = sld [smem:[#allocation5 + $0x1]]
      %v385 = vstv %s384
      %v386 = vmul.f32 %v385, %v369
      %v387 = vmul.f32 %v385, %v370
      %s388 = sld [smem:[#allocation5 + $0x32]]
      %v389 = vstv %s388
      %v390 = vmul.f32 %v389, %v382
      %v391 = vmul.f32 %v389, %v383
      %v392 = vadd.f32 %v386, %v390
      %v393 = vadd.f32 %v387, %v391
      %v394 = vadd.f32 %v288, %v392
      %v395 = vadd.f32 %v289, %v393
      %s396 = sld [smem:[#allocation5 + $0x8]]
      %v397 = vstv %s396
      %v398 = vmul.f32 %v397, %v369
      %v399 = vmul.f32 %v397, %v370
      %s400 = sld [smem:[#allocation5 + $0x39]]
      %v401 = vstv %s400
      %v402 = vmul.f32 %v401, %v382
      %v403 = vmul.f32 %v401, %v383
      %v404 = vadd.f32 %v398, %v402
      %v405 = vadd.f32 %v399, %v403
      %v406 = vadd.f32 %v298, %v404
      %v407 = vadd.f32 %v299, %v405
      %s408 = sld [smem:[#allocation5 + $0xf]]
      %v409 = vstv %s408
      %v410 = vmul.f32 %v409, %v369
      %v411 = vmul.f32 %v409, %v370
      %s412 = sld [smem:[#allocation5 + $0x40]]
      %v413 = vstv %s412
      %v414 = vmul.f32 %v413, %v382
      %v415 = vmul.f32 %v413, %v383
      %v416 = vadd.f32 %v410, %v414
      %v417 = vadd.f32 %v411, %v415
      %v418 = vadd.f32 %v308, %v416
      %v419 = vadd.f32 %v309, %v417
      %s420 = sld [smem:[#allocation5 + $0x16]]
      %v421 = vstv %s420
      %v422 = vmul.f32 %v421, %v369
      %v423 = vmul.f32 %v421, %v370
      %s424 = sld [smem:[#allocation5 + $0x47]]
      %v425 = vstv %s424
      %v426 = vmul.f32 %v425, %v382
      %v427 = vmul.f32 %v425, %v383
      %v428 = vadd.f32 %v422, %v426
      %v429 = vadd.f32 %v423, %v427
      %v430 = vadd.f32 %v318, %v428
      %v431 = vadd.f32 %v319, %v429
      %s432 = sld [smem:[#allocation5 + $0x1d]]
      %v433 = vstv %s432
      %v434 = vmul.f32 %v433, %v369
      %v435 = vmul.f32 %v433, %v370
      %s436 = sld [smem:[#allocation5 + $0x4e]]
      %v437 = vstv %s436
      %v438 = vmul.f32 %v437, %v382
      %v439 = vmul.f32 %v437, %v383
      %v440 = vadd.f32 %v434, %v438
      %v441 = vadd.f32 %v435, %v439
      %v442 = vadd.f32 %v328, %v440
      %v443 = vadd.f32 %v329, %v441
      %s444 = sld [smem:[#allocation5 + $0x24]]
      %v445 = vstv %s444
      %v446 = vmul.f32 %v445, %v369
      %v447 = vmul.f32 %v445, %v370
      %s448 = sld [smem:[#allocation5 + $0x55]]
      %v449 = vstv %s448
      %v450 = vmul.f32 %v449, %v382
      %v451 = vmul.f32 %v449, %v383
      %v452 = vadd.f32 %v446, %v450
      %v453 = vadd.f32 %v447, %v451
      %v454 = vadd.f32 %v338, %v452
      %v455 = vadd.f32 %v339, %v453
      %s456 = sld [smem:[#allocation5 + $0x2b]]
      %v457 = vstv %s456
      %v458 = vmul.f32 %v457, %v369
      %v459 = vmul.f32 %v457, %v370
      %s460 = sld [smem:[#allocation5 + $0x5c]]
      %v461 = vstv %s460
      %v462 = vmul.f32 %v461, %v382
      %v463 = vmul.f32 %v461, %v383
      %v464 = vadd.f32 %v458, %v462
      %v465 = vadd.f32 %v459, %v463
      %v466 = vadd.f32 %v348, %v464
      %v467 = vadd.f32 %v349, %v465
      %s468 = scalar_lea.vmem [#allocation9], 2
      %v469 = vld [vmem:[%s468] ss:$8 sm:$0x3]
      %470 = vst [vmem:[#allocation1] ss:$4 sm:$0xff] %v243
      %v471 = vld.sshfl [vmem:[#allocation1] sm:$0xff pattern:$0x73625140]
      %v472 = vld.sshfl [vmem:[#allocation1 + $0x8] sm:$0xff pattern:$0x73625140]
      %473 = vrot.lane.b32.xlu0 %v471, 1
      %v474 = vpop.permute.xlu0 %473
      %475 = vrot.lane.b32.xlu0 %v472, 1
      %v476 = vpop.permute.xlu0 %475
      %vm477 = vcmask 7168
      %v478 = vsel %vm477, %v474, %v476
      %v481 = vsel %vm477, 0.0, %v474
      %v483 = vperm.slane %v469, 0
      %v484 = vperm.slane %v469, 1
      %v487 = vmul.f32 %v481, %v483
      %v488 = vmul.f32 %v478, %v484
      %489 = vst [vmem:[#allocation1] ss:$4 sm:$0xff] %v244
      %v490 = vld.sshfl [vmem:[#allocation1] sm:$0xff pattern:$0x73625140]
      %v491 = vld.sshfl [vmem:[#allocation1 + $0x8] sm:$0xff pattern:$0x73625140]
      %492 = vrot.lane.b32.xlu0 %v490, 1
      %v493 = vpop.permute.xlu0 %492
      %494 = vrot.lane.b32.xlu0 %v491, 1
      %v495 = vpop.permute.xlu0 %494
      %v496 = vsel %vm477, %v493, %v495
      %v499 = vsel %vm477, 0.0, %v493
      %v500 = vmul.f32 %v499, %v483
      %v501 = vmul.f32 %v496, %v484
      %s502 = sld [smem:[#allocation5 + $0x2]]
      %v503 = vstv %s502
      %v504 = vmul.f32 %v503, %v487
      %v505 = vmul.f32 %v503, %v488
      %s506 = sld [smem:[#allocation5 + $0x33]]
      %v507 = vstv %s506
      %v508 = vmul.f32 %v507, %v500
      %v509 = vmul.f32 %v507, %v501
      %v510 = vadd.f32 %v504, %v508
      %v511 = vadd.f32 %v505, %v509
      %v512 = vadd.f32 %v394, %v510
      %v513 = vadd.f32 %v395, %v511
      %s514 = sld [smem:[#allocation5 + $0x9]]
      %v515 = vstv %s514
      %v516 = vmul.f32 %v515, %v487
      %v517 = vmul.f32 %v515, %v488
      %s518 = sld [smem:[#allocation5 + $0x3a]]
      %v519 = vstv %s518
      %v520 = vmul.f32 %v519, %v500
      %v521 = vmul.f32 %v519, %v501
      %v522 = vadd.f32 %v516, %v520
      %v523 = vadd.f32 %v517, %v521
      %v524 = vadd.f32 %v406, %v522
      %v525 = vadd.f32 %v407, %v523
      %s526 = sld [smem:[#allocation5 + $0x10]]
      %v527 = vstv %s526
      %v528 = vmul.f32 %v527, %v487
      %v529 = vmul.f32 %v527, %v488
      %s530 = sld [smem:[#allocation5 + $0x41]]
      %v531 = vstv %s530
      %v532 = vmul.f32 %v531, %v500
      %v533 = vmul.f32 %v531, %v501
      %v534 = vadd.f32 %v528, %v532
      %v535 = vadd.f32 %v529, %v533
      %v536 = vadd.f32 %v418, %v534
      %v537 = vadd.f32 %v419, %v535
      %s538 = sld [smem:[#allocation5 + $0x17]]
      %v539 = vstv %s538
      %v540 = vmul.f32 %v539, %v487
      %v541 = vmul.f32 %v539, %v488
      %s542 = sld [smem:[#allocation5 + $0x48]]
      %v543 = vstv %s542
      %v544 = vmul.f32 %v543, %v500
      %v545 = vmul.f32 %v543, %v501
      %v546 = vadd.f32 %v540, %v544
      %v547 = vadd.f32 %v541, %v545
      %v548 = vadd.f32 %v430, %v546
      %v549 = vadd.f32 %v431, %v547
      %s550 = sld [smem:[#allocation5 + $0x1e]]
      %v551 = vstv %s550
      %v552 = vmul.f32 %v551, %v487
      %v553 = vmul.f32 %v551, %v488
      %s554 = sld [smem:[#allocation5 + $0x4f]]
      %v555 = vstv %s554
      %v556 = vmul.f32 %v555, %v500
      %v557 = vmul.f32 %v555, %v501
      %v558 = vadd.f32 %v552, %v556
      %v559 = vadd.f32 %v553, %v557
      %v560 = vadd.f32 %v442, %v558
      %v561 = vadd.f32 %v443, %v559
      %s562 = sld [smem:[#allocation5 + $0x25]]
      %v563 = vstv %s562
      %v564 = vmul.f32 %v563, %v487
      %v565 = vmul.f32 %v563, %v488
      %s566 = sld [smem:[#allocation5 + $0x56]]
      %v567 = vstv %s566
      %v568 = vmul.f32 %v567, %v500
      %v569 = vmul.f32 %v567, %v501
      %v570 = vadd.f32 %v564, %v568
      %v571 = vadd.f32 %v565, %v569
      %v572 = vadd.f32 %v454, %v570
      %v573 = vadd.f32 %v455, %v571
      %s574 = sld [smem:[#allocation5 + $0x2c]]
      %v575 = vstv %s574
      %v576 = vmul.f32 %v575, %v487
      %v577 = vmul.f32 %v575, %v488
      %s578 = sld [smem:[#allocation5 + $0x5d]]
      %v579 = vstv %s578
      %v580 = vmul.f32 %v579, %v500
      %v581 = vmul.f32 %v579, %v501
      %v582 = vadd.f32 %v576, %v580
      %v583 = vadd.f32 %v577, %v581
      %v584 = vadd.f32 %v466, %v582
      %v585 = vadd.f32 %v467, %v583
      %s586 = scalar_lea.vmem [#allocation9], 3
      %v587 = vld [vmem:[%s586] ss:$8 sm:$0x3]
      %v589 = vperm.slane %v587, 0
      %v590 = vperm.slane %v587, 1
      %v591 = vrot.slane %v590, 6
      %vm592 = vcmask 1041408
      %v593 = vsel %vm592, %v589, %v591
      %v595 = vmul.f32 %v243, %v593
      %v596 = vmul.f32 %v244, %v593
      %s597 = sld [smem:[#allocation5 + $0x3]]
      %v598 = vstv %s597
      %v599 = vmul.f32 %v598, %v595
      %s600 = sld [smem:[#allocation5 + $0x34]]
      %v601 = vstv %s600
      %v602 = vmul.f32 %v601, %v596
      %v603 = vadd.f32 %v599, %v602
      %605 = vst [vmem:[#allocation1] ss:$4 sm:$0xff] %v603
      %v606 = vld.sshfl [vmem:[#allocation1] sm:$0xff pattern:$0x73625140]
      %v607 = vld.sshfl [vmem:[#allocation1 + $0x8] sm:$0xff pattern:$0x73625140]
      %v610 = vadd.f32 %v512, %v606
      %v611 = vadd.f32 %v513, %v607
      %s612 = sld [smem:[#allocation5 + $0xa]]
      %v613 = vstv %s612
      %v614 = vmul.f32 %v613, %v595
      %s615 = sld [smem:[#allocation5 + $0x3b]]
      %v616 = vstv %s615
      %v617 = vmul.f32 %v616, %v596
      %v618 = vadd.f32 %v614, %v617
      %620 = vst [vmem:[#allocation1] ss:$4 sm:$0xff] %v618
      %v621 = vld.sshfl [vmem:[#allocation1] sm:$0xff pattern:$0x73625140]
      %v622 = vld.sshfl [vmem:[#allocation1 + $0x8] sm:$0xff pattern:$0x73625140]
      %v625 = vadd.f32 %v524, %v621
      %v626 = vadd.f32 %v525, %v622
      %s627 = sld [smem:[#allocation5 + $0x11]]
      %v628 = vstv %s627
      %v629 = vmul.f32 %v628, %v595
      %s630 = sld [smem:[#allocation5 + $0x42]]
      %v631 = vstv %s630
      %v632 = vmul.f32 %v631, %v596
      %v633 = vadd.f32 %v629, %v632
      %635 = vst [vmem:[#allocation1] ss:$4 sm:$0xff] %v633
      %v636 = vld.sshfl [vmem:[#allocation1] sm:$0xff pattern:$0x73625140]
      %v637 = vld.sshfl [vmem:[#allocation1 + $0x8] sm:$0xff pattern:$0x73625140]
      %v640 = vadd.f32 %v536, %v636
      %v641 = vadd.f32 %v537, %v637
      %s642 = sld [smem:[#allocation5 + $0x18]]
      %v643 = vstv %s642
      %v644 = vmul.f32 %v643, %v595
      %s645 = sld [smem:[#allocation5 + $0x49]]
      %v646 = vstv %s645
      %v647 = vmul.f32 %v646, %v596
      %v648 = vadd.f32 %v644, %v647
      %650 = vst [vmem:[#allocation1] ss:$4 sm:$0xff] %v648
      %v651 = vld.sshfl [vmem:[#allocation1] sm:$0xff pattern:$0x73625140]
      %v652 = vld.sshfl [vmem:[#allocation1 + $0x8] sm:$0xff pattern:$0x73625140]
      %v655 = vadd.f32 %v548, %v651
      %v656 = vadd.f32 %v549, %v652
      %s657 = sld [smem:[#allocation5 + $0x1f]]
      %v658 = vstv %s657
      %v659 = vmul.f32 %v658, %v595
      %s660 = sld [smem:[#allocation5 + $0x50]]
      %v661 = vstv %s660
      %v662 = vmul.f32 %v661, %v596
      %v663 = vadd.f32 %v659, %v662
      %665 = vst [vmem:[#allocation1] ss:$4 sm:$0xff] %v663
      %v666 = vld.sshfl [vmem:[#allocation1] sm:$0xff pattern:$0x73625140]
      %v667 = vld.sshfl [vmem:[#allocation1 + $0x8] sm:$0xff pattern:$0x73625140]
      %v670 = vadd.f32 %v560, %v666
      %v671 = vadd.f32 %v561, %v667
      %s672 = sld [smem:[#allocation5 + $0x26]]
      %v673 = vstv %s672
      %v674 = vmul.f32 %v673, %v595
      %s675 = sld [smem:[#allocation5 + $0x57]]
      %v676 = vstv %s675
      %v677 = vmul.f32 %v676, %v596
      %v678 = vadd.f32 %v674, %v677
      %680 = vst [vmem:[#allocation1] ss:$4 sm:$0xff] %v678
      %v681 = vld.sshfl [vmem:[#allocation1] sm:$0xff pattern:$0x73625140]
      %v682 = vld.sshfl [vmem:[#allocation1 + $0x8] sm:$0xff pattern:$0x73625140]
      %v685 = vadd.f32 %v572, %v681
      %v686 = vadd.f32 %v573, %v682
      %s687 = sld [smem:[#allocation5 + $0x2d]]
      %v688 = vstv %s687
      %v689 = vmul.f32 %v688, %v595
      %s690 = sld [smem:[#allocation5 + $0x5e]]
      %v691 = vstv %s690
      %v692 = vmul.f32 %v691, %v596
      %v693 = vadd.f32 %v689, %v692
      %695 = vst [vmem:[#allocation1] ss:$4 sm:$0xff] %v693
      %v696 = vld.sshfl [vmem:[#allocation1] sm:$0xff pattern:$0x73625140]
      %v697 = vld.sshfl [vmem:[#allocation1 + $0x8] sm:$0xff pattern:$0x73625140]
      %v700 = vadd.f32 %v584, %v696
      %v701 = vadd.f32 %v585, %v697
      %s702 = scalar_lea.vmem [#allocation9], 4
      %v703 = vld [vmem:[%s702] ss:$8 sm:$0x3]
      %704 = vst [vmem:[#allocation1] ss:$4 sm:$0xff] %v243
      %v705 = vld.sshfl [vmem:[#allocation1] sm:$0xff pattern:$0x73625140]
      %v706 = vld.sshfl [vmem:[#allocation1 + $0x8] sm:$0xff pattern:$0x73625140]
      %707 = vrot.lane.b32.xlu0 %v705, 127
      %v708 = vpop.permute.xlu0 %707
      %709 = vrot.lane.b32.xlu0 %v706, 127
      %v710 = vpop.permute.xlu0 %709
      %vm711 = vcmask 1039360
      %v712 = vsel %vm711, %v708, %v710
      %v715 = vsel %vm711, %v710, 0.0
      %v717 = vperm.slane %v703, 0
      %v718 = vperm.slane %v703, 1
      %v721 = vmul.f32 %v712, %v717
      %v722 = vmul.f32 %v715, %v718
      %723 = vst [vmem:[#allocation1] ss:$4 sm:$0xff] %v244
      %v724 = vld.sshfl [vmem:[#allocation1] sm:$0xff pattern:$0x73625140]
      %v725 = vld.sshfl [vmem:[#allocation1 + $0x8] sm:$0xff pattern:$0x73625140]
      %726 = vrot.lane.b32.xlu0 %v724, 127
      %v727 = vpop.permute.xlu0 %726
      %728 = vrot.lane.b32.xlu0 %v725, 127
      %v729 = vpop.permute.xlu0 %728
      %v730 = vsel %vm711, %v727, %v729
      %v733 = vsel %vm711, %v729, 0.0
      %v734 = vmul.f32 %v730, %v717
      %v735 = vmul.f32 %v733, %v718
      %s736 = sld [smem:[#allocation5 + $0x4]]
      %v737 = vstv %s736
      %v738 = vmul.f32 %v737, %v721
      %v739 = vmul.f32 %v737, %v722
      %s740 = sld [smem:[#allocation5 + $0x35]]
      %v741 = vstv %s740
      %v742 = vmul.f32 %v741, %v734
      %v743 = vmul.f32 %v741, %v735
      %v744 = vadd.f32 %v738, %v742
      %v745 = vadd.f32 %v739, %v743
      %v746 = vadd.f32 %v610, %v744
      %v747 = vadd.f32 %v611, %v745
      %s748 = sld [smem:[#allocation5 + $0xb]]
      %v749 = vstv %s748
      %v750 = vmul.f32 %v749, %v721
      %v751 = vmul.f32 %v749, %v722
      %s752 = sld [smem:[#allocation5 + $0x3c]]
      %v753 = vstv %s752
      %v754 = vmul.f32 %v753, %v734
      %v755 = vmul.f32 %v753, %v735
      %v756 = vadd.f32 %v750, %v754
      %v757 = vadd.f32 %v751, %v755
      %v758 = vadd.f32 %v625, %v756
      %v759 = vadd.f32 %v626, %v757
      %s760 = sld [smem:[#allocation5 + $0x12]]
      %v761 = vstv %s760
      %v762 = vmul.f32 %v761, %v721
      %v763 = vmul.f32 %v761, %v722
      %s764 = sld [smem:[#allocation5 + $0x43]]
      %v765 = vstv %s764
      %v766 = vmul.f32 %v765, %v734
      %v767 = vmul.f32 %v765, %v735
      %v768 = vadd.f32 %v762, %v766
      %v769 = vadd.f32 %v763, %v767
      %v770 = vadd.f32 %v640, %v768
      %v771 = vadd.f32 %v641, %v769
      %s772 = sld [smem:[#allocation5 + $0x19]]
      %v773 = vstv %s772
      %v774 = vmul.f32 %v773, %v721
      %v775 = vmul.f32 %v773, %v722
      %s776 = sld [smem:[#allocation5 + $0x4a]]
      %v777 = vstv %s776
      %v778 = vmul.f32 %v777, %v734
      %v779 = vmul.f32 %v777, %v735
      %v780 = vadd.f32 %v774, %v778
      %v781 = vadd.f32 %v775, %v779
      %v782 = vadd.f32 %v655, %v780
      %v783 = vadd.f32 %v656, %v781
      %s784 = sld [smem:[#allocation5 + $0x20]]
      %v785 = vstv %s784
      %v786 = vmul.f32 %v785, %v721
      %v787 = vmul.f32 %v785, %v722
      %s788 = sld [smem:[#allocation5 + $0x51]]
      %v789 = vstv %s788
      %v790 = vmul.f32 %v789, %v734
      %v791 = vmul.f32 %v789, %v735
      %v792 = vadd.f32 %v786, %v790
      %v793 = vadd.f32 %v787, %v791
      %v794 = vadd.f32 %v670, %v792
      %v795 = vadd.f32 %v671, %v793
      %s796 = sld [smem:[#allocation5 + $0x27]]
      %v797 = vstv %s796
      %v798 = vmul.f32 %v797, %v721
      %v799 = vmul.f32 %v797, %v722
      %s800 = sld [smem:[#allocation5 + $0x58]]
      %v801 = vstv %s800
      %v802 = vmul.f32 %v801, %v734
      %v803 = vmul.f32 %v801, %v735
      %v804 = vadd.f32 %v798, %v802
      %v805 = vadd.f32 %v799, %v803
      %v806 = vadd.f32 %v685, %v804
      %v807 = vadd.f32 %v686, %v805
      %s808 = sld [smem:[#allocation5 + $0x2e]]
      %v809 = vstv %s808
      %v810 = vmul.f32 %v809, %v721
      %v811 = vmul.f32 %v809, %v722
      %s812 = sld [smem:[#allocation5 + $0x5f]]
      %v813 = vstv %s812
      %v814 = vmul.f32 %v813, %v734
      %v815 = vmul.f32 %v813, %v735
      %v816 = vadd.f32 %v810, %v814
      %v817 = vadd.f32 %v811, %v815
      %v818 = vadd.f32 %v700, %v816
      %v819 = vadd.f32 %v701, %v817
      %s820 = scalar_lea.vmem [#allocation9], 5
      %v821 = vld [vmem:[%s820] ss:$8 sm:$0x3]
      %822 = vst [vmem:[#allocation1] ss:$4 sm:$0xff] %v243
      %v823 = vld.sshfl [vmem:[#allocation1] sm:$0xff pattern:$0x73625140]
      %v824 = vld.sshfl [vmem:[#allocation1 + $0x8] sm:$0xff pattern:$0x73625140]
      %825 = vrot.lane.b32.xlu0 %v823, 126
      %v826 = vpop.permute.xlu0 %825
      %827 = vrot.lane.b32.xlu0 %v824, 126
      %v828 = vpop.permute.xlu0 %827
      %vm829 = vcmask 1031168
      %v830 = vsel %vm829, %v826, %v828
      %v833 = vsel %vm829, %v828, 0.0
      %v835 = vperm.slane %v821, 0
      %v836 = vperm.slane %v821, 1
      %v839 = vmul.f32 %v830, %v835
      %v840 = vmul.f32 %v833, %v836
      %841 = vst [vmem:[#allocation1] ss:$4 sm:$0xff] %v244
      %v842 = vld.sshfl [vmem:[#allocation1] sm:$0xff pattern:$0x73625140]
      %v843 = vld.sshfl [vmem:[#allocation1 + $0x8] sm:$0xff pattern:$0x73625140]
      %844 = vrot.lane.b32.xlu0 %v842, 126
      %v845 = vpop.permute.xlu0 %844
      %846 = vrot.lane.b32.xlu0 %v843, 126
      %v847 = vpop.permute.xlu0 %846
      %v848 = vsel %vm829, %v845, %v847
      %v851 = vsel %vm829, %v847, 0.0
      %v852 = vmul.f32 %v848, %v835
      %v853 = vmul.f32 %v851, %v836
      %s854 = sld [smem:[#allocation5 + $0x5]]
      %v855 = vstv %s854
      %v856 = vmul.f32 %v855, %v839
      %v857 = vmul.f32 %v855, %v840
      %s858 = sld [smem:[#allocation5 + $0x36]]
      %v859 = vstv %s858
      %v860 = vmul.f32 %v859, %v852
      %v861 = vmul.f32 %v859, %v853
      %v862 = vadd.f32 %v856, %v860
      %v863 = vadd.f32 %v857, %v861
      %v864 = vadd.f32 %v746, %v862
      %v865 = vadd.f32 %v747, %v863
      %s866 = sld [smem:[#allocation5 + $0xc]]
      %v867 = vstv %s866
      %v868 = vmul.f32 %v867, %v839
      %v869 = vmul.f32 %v867, %v840
      %s870 = sld [smem:[#allocation5 + $0x3d]]
      %v871 = vstv %s870
      %v872 = vmul.f32 %v871, %v852
      %v873 = vmul.f32 %v871, %v853
      %v874 = vadd.f32 %v868, %v872
      %v875 = vadd.f32 %v869, %v873
      %v876 = vadd.f32 %v758, %v874
      %v877 = vadd.f32 %v759, %v875
      %s878 = sld [smem:[#allocation5 + $0x13]]
      %v879 = vstv %s878
      %v880 = vmul.f32 %v879, %v839
      %v881 = vmul.f32 %v879, %v840
      %s882 = sld [smem:[#allocation5 + $0x44]]
      %v883 = vstv %s882
      %v884 = vmul.f32 %v883, %v852
      %v885 = vmul.f32 %v883, %v853
      %v886 = vadd.f32 %v880, %v884
      %v887 = vadd.f32 %v881, %v885
      %v888 = vadd.f32 %v770, %v886
      %v889 = vadd.f32 %v771, %v887
      %s890 = sld [smem:[#allocation5 + $0x1a]]
      %v891 = vstv %s890
      %v892 = vmul.f32 %v891, %v839
      %v893 = vmul.f32 %v891, %v840
      %s894 = sld [smem:[#allocation5 + $0x4b]]
      %v895 = vstv %s894
      %v896 = vmul.f32 %v895, %v852
      %v897 = vmul.f32 %v895, %v853
      %v898 = vadd.f32 %v892, %v896
      %v899 = vadd.f32 %v893, %v897
      %v900 = vadd.f32 %v782, %v898
      %v901 = vadd.f32 %v783, %v899
      %s902 = sld [smem:[#allocation5 + $0x21]]
      %v903 = vstv %s902
      %v904 = vmul.f32 %v903, %v839
      %v905 = vmul.f32 %v903, %v840
      %s906 = sld [smem:[#allocation5 + $0x52]]
      %v907 = vstv %s906
      %v908 = vmul.f32 %v907, %v852
      %v909 = vmul.f32 %v907, %v853
      %v910 = vadd.f32 %v904, %v908
      %v911 = vadd.f32 %v905, %v909
      %v912 = vadd.f32 %v794, %v910
      %v913 = vadd.f32 %v795, %v911
      %s914 = sld [smem:[#allocation5 + $0x28]]
      %v915 = vstv %s914
      %v916 = vmul.f32 %v915, %v839
      %v917 = vmul.f32 %v915, %v840
      %s918 = sld [smem:[#allocation5 + $0x59]]
      %v919 = vstv %s918
      %v920 = vmul.f32 %v919, %v852
      %v921 = vmul.f32 %v919, %v853
      %v922 = vadd.f32 %v916, %v920
      %v923 = vadd.f32 %v917, %v921
      %v924 = vadd.f32 %v806, %v922
      %v925 = vadd.f32 %v807, %v923
      %s926 = sld [smem:[#allocation5 + $0x2f]]
      %v927 = vstv %s926
      %v928 = vmul.f32 %v927, %v839
      %v929 = vmul.f32 %v927, %v840
      %s930 = sld [smem:[#allocation5 + $0x60]]
      %v931 = vstv %s930
      %v932 = vmul.f32 %v931, %v852
      %v933 = vmul.f32 %v931, %v853
      %v934 = vadd.f32 %v928, %v932
      %v935 = vadd.f32 %v929, %v933
      %v936 = vadd.f32 %v818, %v934
      %v937 = vadd.f32 %v819, %v935
      %s938 = scalar_lea.vmem [#allocation9], 6
      %v939 = vld [vmem:[%s938] ss:$8 sm:$0x3]
      %940 = vst [vmem:[#allocation1] ss:$4 sm:$0xff] %v243
      %v941 = vld.sshfl [vmem:[#allocation1] sm:$0xff pattern:$0x73625140]
      %v942 = vld.sshfl [vmem:[#allocation1 + $0x8] sm:$0xff pattern:$0x73625140]
      %943 = vrot.lane.b32.xlu0 %v941, 125
      %v944 = vpop.permute.xlu0 %943
      %945 = vrot.lane.b32.xlu0 %v942, 125
      %v946 = vpop.permute.xlu0 %945
      %vm947 = vcmask 1022976
      %v948 = vsel %vm947, %v944, %v946
      %v951 = vsel %vm947, %v946, 0.0
      %v953 = vperm.slane %v939, 0
      %v954 = vperm.slane %v939, 1
      %v957 = vmul.f32 %v948, %v953
      %v958 = vmul.f32 %v951, %v954
      %959 = vst [vmem:[#allocation1] ss:$4 sm:$0xff] %v244
      %v960 = vld.sshfl [vmem:[#allocation1] sm:$0xff pattern:$0x73625140]
      %v961 = vld.sshfl [vmem:[#allocation1 + $0x8] sm:$0xff pattern:$0x73625140]
      %962 = vrot.lane.b32.xlu0 %v960, 125
      %v963 = vpop.permute.xlu0 %962
      %964 = vrot.lane.b32.xlu0 %v961, 125
      %v965 = vpop.permute.xlu0 %964
      %v966 = vsel %vm947, %v963, %v965
      %v969 = vsel %vm947, %v965, 0.0
      %v970 = vmul.f32 %v966, %v953
      %v971 = vmul.f32 %v969, %v954
      %s972 = sld [smem:[#allocation5 + $0x6]]
      %v973 = vstv %s972
      %v974 = vmul.f32 %v973, %v957
      %v975 = vmul.f32 %v973, %v958
      %s976 = sld [smem:[#allocation5 + $0x37]]
      %v977 = vstv %s976
      %v978 = vmul.f32 %v977, %v970
      %v979 = vmul.f32 %v977, %v971
      %v980 = vadd.f32 %v974, %v978
      %v981 = vadd.f32 %v975, %v979
      %v982 = vadd.f32 %v864, %v980
      %v983 = vadd.f32 %v865, %v981
      %s984 = sld [smem:[#allocation5 + $0xd]]
      %v985 = vstv %s984
      %v986 = vmul.f32 %v985, %v957
      %v987 = vmul.f32 %v985, %v958
      %s988 = sld [smem:[#allocation5 + $0x3e]]
      %v989 = vstv %s988
      %v990 = vmul.f32 %v989, %v970
      %v991 = vmul.f32 %v989, %v971
      %v992 = vadd.f32 %v986, %v990
      %v993 = vadd.f32 %v987, %v991
      %v994 = vadd.f32 %v876, %v992
      %v995 = vadd.f32 %v877, %v993
      %s996 = sld [smem:[#allocation5 + $0x14]]
      %v997 = vstv %s996
      %v998 = vmul.f32 %v997, %v957
      %v999 = vmul.f32 %v997, %v958
      %s1000 = sld [smem:[#allocation5 + $0x45]]
      %v1001 = vstv %s1000
      %v1002 = vmul.f32 %v1001, %v970
      %v1003 = vmul.f32 %v1001, %v971
      %v1004 = vadd.f32 %v998, %v1002
      %v1005 = vadd.f32 %v999, %v1003
      %v1006 = vadd.f32 %v888, %v1004
      %v1007 = vadd.f32 %v889, %v1005
      %s1008 = sld [smem:[#allocation5 + $0x1b]]
      %v1009 = vstv %s1008
      %v1010 = vmul.f32 %v1009, %v957
      %v1011 = vmul.f32 %v1009, %v958
      %s1012 = sld [smem:[#allocation5 + $0x4c]]
      %v1013 = vstv %s1012
      %v1014 = vmul.f32 %v1013, %v970
      %v1015 = vmul.f32 %v1013, %v971
      %v1016 = vadd.f32 %v1010, %v1014
      %v1017 = vadd.f32 %v1011, %v1015
      %v1018 = vadd.f32 %v900, %v1016
      %v1019 = vadd.f32 %v901, %v1017
      %s1020 = sld [smem:[#allocation5 + $0x22]]
      %v1021 = vstv %s1020
      %v1022 = vmul.f32 %v1021, %v957
      %v1023 = vmul.f32 %v1021, %v958
      %s1024 = sld [smem:[#allocation5 + $0x53]]
      %v1025 = vstv %s1024
      %v1026 = vmul.f32 %v1025, %v970
      %v1027 = vmul.f32 %v1025, %v971
      %v1028 = vadd.f32 %v1022, %v1026
      %v1029 = vadd.f32 %v1023, %v1027
      %v1030 = vadd.f32 %v912, %v1028
      %v1031 = vadd.f32 %v913, %v1029
      %s1032 = sld [smem:[#allocation5 + $0x29]]
      %v1033 = vstv %s1032
      %v1034 = vmul.f32 %v1033, %v957
      %v1035 = vmul.f32 %v1033, %v958
      %s1036 = sld [smem:[#allocation5 + $0x5a]]
      %v1037 = vstv %s1036
      %v1038 = vmul.f32 %v1037, %v970
      %v1039 = vmul.f32 %v1037, %v971
      %v1040 = vadd.f32 %v1034, %v1038
      %v1041 = vadd.f32 %v1035, %v1039
      %v1042 = vadd.f32 %v924, %v1040
      %v1043 = vadd.f32 %v925, %v1041
      %s1044 = sld [smem:[#allocation5 + $0x30]]
      %v1045 = vstv %s1044
      %v1046 = vmul.f32 %v1045, %v957
      %v1047 = vmul.f32 %v1045, %v958
      %s1048 = sld [smem:[#allocation5 + $0x61]]
      %v1049 = vstv %s1048
      %v1050 = vmul.f32 %v1049, %v970
      %v1051 = vmul.f32 %v1049, %v971
      %v1052 = vadd.f32 %v1046, %v1050
      %v1053 = vadd.f32 %v1047, %v1051
      %v1054 = vadd.f32 %v936, %v1052
      %v1055 = vadd.f32 %v937, %v1053
      %s1056 = sld [smem:[#allocation4]]
      %v1057 = vstv %s1056
      %1060 = vrot.lane.b32.xlu0 %v982, 48
      %v1061 = vpop.permute.xlu0 %1060
      %1062 = vrot.lane.b32.xlu0 %v983, 48
      %v1063 = vpop.permute.xlu0 %1062
      %vm1064 = vcmask 392192
      %v1065 = vsel %vm1064, %v1061, %v1063
      %v1068 = vsel %vm1064, 0.0, %v1061
      %v1069 = vadd.f32 %v1057, %v1068
      %v1070 = vadd.f32 %v1057, %v1065
      %1073 = vrot.lane.b32.xlu0 %v994, 32
      %v1074 = vpop.permute.xlu0 %1073
      %1075 = vrot.lane.b32.xlu0 %v995, 32
      %v1076 = vpop.permute.xlu0 %1075
      %vm1077 = vcmask 261120
      %v1078 = vsel %vm1077, %v1074, %v1076
      %v1081 = vsel %vm1077, 0.0, %v1074
      %v1082 = vadd.f32 %v1069, %v1081
      %v1083 = vadd.f32 %v1070, %v1078
      %1086 = vrot.lane.b32.xlu0 %v1006, 16
      %v1087 = vpop.permute.xlu0 %1086
      %1088 = vrot.lane.b32.xlu0 %v1007, 16
      %v1089 = vpop.permute.xlu0 %1088
      %vm1090 = vcmask 130048
      %v1091 = vsel %vm1090, %v1087, %v1089
      %v1094 = vsel %vm1090, 0.0, %v1087
      %v1095 = vadd.f32 %v1082, %v1094
      %v1096 = vadd.f32 %v1083, %v1091
      %v1097 = vadd.f32 %v1095, %v1018
      %v1098 = vadd.f32 %v1096, %v1019
      %1101 = vrot.lane.b32.xlu0 %v1030, 112
      %v1102 = vpop.permute.xlu0 %1101
      %1103 = vrot.lane.b32.xlu0 %v1031, 112
      %v1104 = vpop.permute.xlu0 %1103
      %vm1105 = vcmask 916480
      %v1106 = vsel %vm1105, %v1102, %v1104
      %v1109 = vsel %vm1105, %v1104, 0.0
      %v1110 = vadd.f32 %v1097, %v1106
      %v1111 = vadd.f32 %v1098, %v1109
      %1114 = vrot.lane.b32.xlu0 %v1042, 96
      %v1115 = vpop.permute.xlu0 %1114
      %1116 = vrot.lane.b32.xlu0 %v1043, 96
      %v1117 = vpop.permute.xlu0 %1116
      %vm1118 = vcmask 785408
      %v1119 = vsel %vm1118, %v1115, %v1117
      %v1122 = vsel %vm1118, %v1117, 0.0
      %v1123 = vadd.f32 %v1110, %v1119
      %v1124 = vadd.f32 %v1111, %v1122
      %1127 = vrot.lane.b32.xlu0 %v1054, 80
      %v1128 = vpop.permute.xlu0 %1127
      %1129 = vrot.lane.b32.xlu0 %v1055, 80
      %v1130 = vpop.permute.xlu0 %1129
      %vm1131 = vcmask 654336
      %v1132 = vsel %vm1131, %v1128, %v1130
      %v1135 = vsel %vm1131, %v1130, 0.0
      %v1136 = vadd.f32 %v1123, %v1132
      %v1137 = vadd.f32 %v1124, %v1135
      %v1138 = vxor.u32 %v1136, 2147483648
      %v1139 = vxor.u32 %v1137, 2147483648
      %v1140 = vmul.f32 %v1138, 1.442695
      %v1141 = vpow.pop %v1140
      %v1142 = vmul.f32 %v1139, 1.442695
      %v1143 = vpow.pop %v1142
      %v1144 = vadd.f32 %v1141, 1.0
      %v1145 = vadd.f32 %v1143, 1.0
      %v1146 = vrcp.pop %v1144
      %v1147 = vmul.f32 %v1144, %v1146
      %v1148 = vsub.f32 1.0, %v1147
      %v1149 = vmul.f32 %v1146, %v1148
      %v1150 = vadd.f32 %v1146, %v1149
      %vm1151 = vweird.f32 %v1144
      %vm1152 = vweird.f32 %v1146
      %vm1153 = vmor %vm1151, %vm1152
      %v1154 = vsel %vm1153, %v1146, %v1150
      %v1155 = vand.u32 2147483647, %v1144
      %vm1156 = vcmp.eq.f32.partialorder %v1155, 8.507059e+37
      %v1157 = vand.u32 %v1144, 2147483648
      %v1158 = vor.u32 1.1754944e-38, %v1157
      %v1159 = vsel %vm1156, %v1158, %v1154
      %v1160 = vmul.f32 1.0, %v1159
      %v1161 = vrcp.pop %v1145
      %v1162 = vmul.f32 %v1145, %v1161
      %v1163 = vsub.f32 1.0, %v1162
      %v1164 = vmul.f32 %v1161, %v1163
      %v1165 = vadd.f32 %v1161, %v1164
      %vm1166 = vweird.f32 %v1145
      %vm1167 = vweird.f32 %v1161
      %vm1168 = vmor %vm1166, %vm1167
      %v1169 = vsel %vm1168, %v1161, %v1165
      %v1170 = vand.u32 2147483647, %v1145
      %vm1171 = vcmp.eq.f32.partialorder %v1170, 8.507059e+37
      %v1172 = vand.u32 %v1145, 2147483648
      %v1173 = vor.u32 1.1754944e-38, %v1172
      %v1174 = vsel %vm1171, %v1173, %v1169
      %v1175 = vmul.f32 1.0, %v1174
      %v1178 = vrot.slane %v1175, 6
      %v1179 = vsel %vm592, %v1160, %v1178
      %1181 = vst [vmem:[#allocation12] sm:$0xf] %v1179
    $region41: #{tpu_custom_call.1} parent=1 // pred_fallthru
      _
    // Predicated region
    $region42: #{tpu_custom_call.1} parent=1 // pred_check
      _
    $region43: #{tpu_custom_call.1} parent=1 // pred_check_branch
      %1183 = sbr.rel (0) target = $region45
    $region44: #{tpu_custom_call.1} parent=1 // pred_region
      %1185 = vsyncadd [#allocation7], 0
      %s1187 = sshll.u32 [#allocation12], 4
      %s1188 = int_to_ptr.vmem [resolvable:$true] %s1187
      %s1189 = sshll.u32 %s4, 4
      %s1190 = int_to_ptr.hbm [resolvable:$true] %s1189
      %1192 = dma.vmem_to_hbm [thread:$0]  %s1188, 64, %s1190, [#allocation7]
    $region45: #{tpu_custom_call.1} parent=1 // pred_fallthru
      _
    // Predicated region
    $region46: #{tpu_custom_call.1} parent=1 // pred_check
      _
    $region47: #{tpu_custom_call.1} parent=1 // pred_check_branch
      %1194 = sbr.rel (0) target = $region49
    $region48: #{tpu_custom_call.1} parent=1 // pred_region
      %1196 = dma.done [#allocation7], 64
    $region49: #{tpu_custom_call.1} parent=1 // pred_fallthru
      _
    %1197 = vsyncpa [#allocation6], 1
    %1198 = vsyncpa [#allocation11], 1
    %1199 = vsyncpa [#allocation7], 1
    %1200 = vsyncpa [#allocation8], 1

</llo_original>
